<compile_context>
chip_gen: v7x
topology: tpu7x:2x2x1
jax: 0.10.0
libtpu: 0.0.40
codegen_flags: <defaults>
</compile_context>

<pallas_src>
import functools

import jax
import jax.numpy as jnp
from jax import lax
from jax.experimental import pallas as pl
from jax.experimental.pallas import tpu as pltpu


def _leaky(x, slope):
    return jnp.where(x >= 0, x, slope * x)


def _round_up(n, m):
    return ((n + m - 1) // m) * m


def generator_kernel(x_aug_ref, noise_ref, last_idx_ref, x_last_ref,
                     we1_ref, we2_ref, wih_ref, whh_ref,
                     wf1_ref, wf2_ref, wf3_ref, bias_ref,
                     out_ref,
                     gx_s,
                     *, relu_slope, seq_len, bsp):
    T, BSP = seq_len, bsp
    H = whh_ref.shape[0]
    E0 = we1_ref.shape[1]
    E1 = we2_ref.shape[1]
    H0 = wf1_ref.shape[1]
    H1 = wf2_ref.shape[1]
    ND = noise_ref.shape[1]

    # ---- unpack the packed bias slab (static, one-time, off the serial path) ----
    be1 = bias_ref[0:1, :E0]
    be2 = bias_ref[1:2, :E1]
    bl = bias_ref[2:3, :4 * H]
    bf1 = bias_ref[3:4, :H0]
    bf2 = bias_ref[4:5, :H1]
    bf3 = bias_ref[5:6, :2]

    # ---- embedding MLP over all (T*BSP) rows in one MXU pass each ----
    x = x_aug_ref[...]                                            # (T*BSP, 4)
    h1 = _leaky(
        jnp.dot(x, we1_ref[...], preferred_element_type=jnp.float32) + be1,
        relu_slope)
    e = _leaky(
        jnp.dot(h1, we2_ref[...], preferred_element_type=jnp.float32) + be2,
        relu_slope)                                               # (T*BSP, E)

    # ---- hoisted, fused LSTM input projection: ONE matmul, ONE lane-dense scratch ----
    # 4H = 128 lanes -> unmasked full-lane vst into gx_s.
    gx_s[...] = jnp.dot(e, wih_ref[...], preferred_element_type=jnp.float32) + bl

    # ---- FC-head noise branch hoisted above the recurrence (independent of it) ----
    wf1_h = wf1_ref[0:H, :]                                       # (H, H0)
    wf1_n = wf1_ref[H:H + ND, :]                                  # (ND, H0) sublane-aligned (H % 8 == 0)
    noise_proj = (jnp.dot(noise_ref[...], wf1_n,
                          preferred_element_type=jnp.float32) + bf1)

    whh = whh_ref[...]                                            # (H, 4H)
    last_idx = last_idx_ref[...]                                  # (BSP, 1) int32 (padding rows = -1)

    h = jnp.zeros((BSP, H), jnp.float32)
    c = jnp.zeros((BSP, H), jnp.float32)
    h_last = jnp.zeros((BSP, H), jnp.float32)

    # ---- fully-unrolled recurrence: 1 fused matmul + 2 gate EUP pushes + tanh(c) per step ----
    for t in range(T):
        # slab start t*BSP is a static multiple of 8 -> aligned full-tile read.
        gates = gx_s[pl.ds(t * BSP, BSP), :] + jnp.dot(
            h, whh, preferred_element_type=jnp.float32)           # (BSP, 4H)
        sig = jax.nn.sigmoid(gates)                               # one EUP pass, full 128 lanes
        th = jnp.tanh(gates)                                      # one EUP pass, full 128 lanes
        i_g = sig[:, 0:H]
        f_g = sig[:, H:2 * H]
        g_g = th[:, 2 * H:3 * H]
        o_g = sig[:, 3 * H:4 * H]
        c = f_g * c + i_g * g_g
        h = o_g * jnp.tanh(c)
        # capture lstm_out[b, x_lengths[b]-1]; t is a Python constant here.
        h_last = jnp.where(last_idx == t, h, h_last)

    # ---- FC head tail: single dependent matmul chain after the loop ----
    y = _leaky(
        jnp.dot(h_last, wf1_h, preferred_element_type=jnp.float32) + noise_proj,
        relu_slope)
    y = _leaky(
        jnp.dot(y, wf2_ref[...], preferred_element_type=jnp.float32) + bf2,
        relu_slope)
    y = jnp.dot(y, wf3_ref[...], preferred_element_type=jnp.float32) + bf3
    out_ref[...] = y + x_last_ref[...]


def _pack_biases(biases):
    """Pack small (1, n_i) biases into one (len, max_n) slab (one DMA)."""
    width = max(int(b.size) for b in biases)
    rows = [jnp.pad(b.reshape(1, -1), ((0, 0), (0, width - int(b.size))))
            for b in biases]
    return jnp.concatenate(rows, axis=0)


def _prep_inputs(x_in, noise, x_lengths, bsp):
    """Velocity augmentation + last-index prep (fuses under the enclosing jit).

    NOTE: assumes every x_lengths entry is in [2, T] (the PyTorch module indexes
    both len-1 and len-2); indices are clamped defensively.
    """
    bs, T, _ = x_in.shape
    idx_b = jnp.arange(bs)
    last = jnp.clip(jnp.asarray(x_lengths, jnp.int32) - 1, 1, T - 1)
    prev = last - 1

    x_vel = jnp.concatenate(
        [x_in[:, 1:] - x_in[:, :-1], jnp.zeros((bs, 1, 2), x_in.dtype)], axis=1)
    # x_in_vel[b, len-1] = x_in_vel[b, len-2]
    x_vel = x_vel.at[idx_b, last].set(x_vel[idx_b, prev])

    x_aug = jnp.concatenate([x_in, x_vel], axis=2)                # (bs, T, 4)
    # time-major, batch padded to BSP so each per-timestep slab is sublane-aligned.
    x_aug_tm = jnp.transpose(x_aug, (1, 0, 2))                    # (T, bs, 4)
    x_aug_tm = jnp.pad(x_aug_tm, ((0, 0), (0, bsp - bs), (0, 0)))
    x_aug_flat = x_aug_tm.reshape(T * bsp, 4)

    x_last = jnp.pad(x_in[idx_b, last], ((0, bsp - bs), (0, 0)))  # (BSP, 2)
    last_idx = jnp.pad(last[:, None].astype(jnp.int32),
                       ((0, bsp - bs), (0, 0)), constant_values=-1)  # (BSP, 1)
    noise_pad = jnp.pad(noise, ((0, bsp - bs), (0, 0)))           # (BSP, ND)
    return x_aug_flat, noise_pad, last_idx, x_last


@functools.partial(jax.jit, static_argnums=(4,))
def generator_forward(x_in, noise, x_lengths, params, relu_slope):
    bs, T, _ = x_in.shape
    bsp = _round_up(bs, 8)
    x_aug_flat, noise_pad, last_idx, x_last = _prep_inputs(x_in, noise, x_lengths, bsp)

    (we1, be1, we2, be2, wih_t, whh_t, bl,
     wf1, bf1, wf2, bf2, wf3, bf3) = params
    H = whh_t.shape[0]

    bias_pack = _pack_biases([be1, be2, bl, bf1, bf2, bf3])       # (6, 128)

    inputs = (x_aug_flat, noise_pad, last_idx, x_last,
              we1, we2, wih_t, whh_t, wf1, wf2, wf3, bias_pack)   # 12 operands

    vmem = pl.BlockSpec(memory_space=pltpu.MemorySpace.VMEM)
    kernel = functools.partial(generator_kernel, relu_slope=relu_slope,
                               seq_len=T, bsp=bsp)

    # Grid-less: weights + T*BSP activations are tiny and fit in VMEM on
    # v5e/v6e (128 MiB) and v7x (64 MiB).
    # TODO(synk): for large batch sizes add grid=(pl.cdiv(bs, TB),) tiling the
    # batch axis with dimension_semantics=("parallel",) to use both v7x cores,
    # and raise vmem_limit_bytes once 4*T*BSP*4H*4B approaches the scoped limit.
    out = pl.pallas_call(
        kernel,
        out_shape=jax.ShapeDtypeStruct((bsp, 2), jnp.float32),
        in_specs=[vmem] * len(inputs),
        out_specs=vmem,
        scratch_shapes=[pltpu.VMEM((T * bsp, 4 * H), jnp.float32)],
    )(*inputs)
    return out[:bs]


def reference_forward(x_in, noise, x_lengths, params, relu_slope):
    """Pure-JAX reference replicating the PyTorch forward."""
    bs, T, _ = x_in.shape
    (we1, be1, we2, be2, wih_t, whh_t, bl,
     wf1, bf1, wf2, bf2, wf3, bf3) = params
    H = whh_t.shape[0]
    idx_b = jnp.arange(bs)
    last = jnp.clip(jnp.asarray(x_lengths, jnp.int32) - 1, 1, T - 1)
    prev = last - 1

    def leaky(v):
        return jnp.where(v >= 0, v, relu_slope * v)

    x_vel = jnp.concatenate(
        [x_in[:, 1:] - x_in[:, :-1], jnp.zeros((bs, 1, 2), x_in.dtype)], axis=1)
    x_vel = x_vel.at[idx_b, last].set(x_vel[idx_b, prev])
    x_aug = jnp.concatenate([x_in, x_vel], axis=2)                # (bs, T, 4)

    e = leaky(x_aug @ we1 + be1)
    e = leaky(e @ we2 + be2)                                      # (bs, T, E)
    e_tm = jnp.transpose(e, (1, 0, 2))                            # (T, bs, E)

    def step(carry, e_t):
        h, c = carry
        gates = e_t @ wih_t + h @ whh_t + bl
        i_g = jax.nn.sigmoid(gates[:, :H])
        f_g = jax.nn.sigmoid(gates[:, H:2 * H])
        g_g = jnp.tanh(gates[:, 2 * H:3 * H])
        o_g = jax.nn.sigmoid(gates[:, 3 * H:])
        c = f_g * c + i_g * g_g
        h = o_g * jnp.tanh(c)
        return (h, c), h

    (_, _), hs = lax.scan(step, (jnp.zeros((bs, H)), jnp.zeros((bs, H))), e_tm)
    h_last = jnp.transpose(hs, (1, 0, 2))[idx_b, last]
    hid = jnp.concatenate([h_last, noise], axis=1)
    y = leaky(hid @ wf1 + bf1)
    y = leaky(y @ wf2 + bf2)
    y = y @ wf3 + bf3
    return y + x_in[idx_b, last]


def init_params(key, noise_dim, embedding_size, lstm_size, hidden_size):
    keys = jax.random.split(key, 16)

    def u(k, shape, fan_in):
        bound = 1.0 / jnp.sqrt(jnp.float32(fan_in))
        return jax.random.uniform(k, shape, jnp.float32, -bound, bound)

    e0, e1 = embedding_size
    h0, h1 = hidden_size
    we1 = u(keys[0], (4, e0), 4)
    be1 = u(keys[1], (1, e0), 4)
    we2 = u(keys[2], (e0, e1), e0)
    be2 = u(keys[3], (1, e1), e0)
    # LSTM weights, stored transposed (in, 4H); bias = b_ih + b_hh, drawn as two
    # independent U(-1/sqrt(H), 1/sqrt(H)) samples to match the PyTorch init.
    wih_t = u(keys[4], (e1, 4 * lstm_size), lstm_size)
    whh_t = u(keys[5], (lstm_size, 4 * lstm_size), lstm_size)
    bl = (u(keys[6], (1, 4 * lstm_size), lstm_size) +
          u(keys[13], (1, 4 * lstm_size), lstm_size))
    wf1 = u(keys[7], (lstm_size + noise_dim, h0), lstm_size + noise_dim)
    bf1 = u(keys[8], (1, h0), lstm_size + noise_dim)
    wf2 = u(keys[9], (h0, h1), h0)
    bf2 = u(keys[10], (1, h1), h0)
    wf3 = u(keys[11], (h1, 2), h1)
    bf3 = u(keys[12], (1, 2), h1)
    return (we1, be1, we2, be2, wih_t, whh_t, bl, wf1, bf1, wf2, bf2, wf3, bf3)


if __name__ == "__main__":
    key = jax.random.PRNGKey(0)
    bs, T, noise_dim = 2, 8, 8
    embedding_size = (16, 32)
    lstm_size = 32
    hidden_size = (32, 16)
    relu_slope = 0.2

    pkey, xkey, nkey = jax.random.split(key, 3)
    params = init_params(pkey, noise_dim, embedding_size, lstm_size, hidden_size)

    x_in = jax.random.normal(xkey, (bs, T, 2), jnp.float32)
    noise = jax.random.normal(nkey, (bs, noise_dim), jnp.float32)
    x_lengths = jnp.array([T, T - 3], jnp.int32)   # variable-length (padded to T), all >= 2

    out = generator_forward(x_in, noise, x_lengths, params, relu_slope)
    out = jax.block_until_ready(out)

    ref = reference_forward(x_in, noise, x_lengths, params, relu_slope)
    assert out.shape == (bs, 2)
    assert jnp.allclose(out, ref, atol=1e-4, rtol=1e-4), (out, ref)
    print("KERNEL_OK")
</pallas_src>

<mosaic_0001>
module attributes {stable_mosaic.version = 11 : i64} {
  func.func @generator_kernel(%arg0: memref<64x4xf32, #tpu.memory_space<vmem>>, %arg1: memref<8x8xf32, #tpu.memory_space<vmem>>, %arg2: memref<8x1xi32, #tpu.memory_space<vmem>>, %arg3: memref<8x2xf32, #tpu.memory_space<vmem>>, %arg4: memref<4x16xf32, #tpu.memory_space<vmem>>, %arg5: memref<16x32xf32, #tpu.memory_space<vmem>>, %arg6: memref<32x128xf32, #tpu.memory_space<vmem>>, %arg7: memref<32x128xf32, #tpu.memory_space<vmem>>, %arg8: memref<40x32xf32, #tpu.memory_space<vmem>>, %arg9: memref<32x16xf32, #tpu.memory_space<vmem>>, %arg10: memref<16x2xf32, #tpu.memory_space<vmem>>, %arg11: memref<6x128xf32, #tpu.memory_space<vmem>>, %arg12: memref<8x2xf32, #tpu.memory_space<vmem>>, %arg13: memref<64x128xf32, #tpu.memory_space<vmem>>) attributes {dimension_semantics = [], scalar_prefetch = 0 : i64, scratch_operands = 1 : i64, tpu.core_type = #tpu.core_type<tc>} {
    %c0 = arith.constant 0 : index
    %c0_0 = arith.constant 0 : index
    %0 = vector.load %arg11[%c0, %c0_0] : memref<6x128xf32, #tpu.memory_space<vmem>>, vector<1x16xf32>
    %c1 = arith.constant 1 : index
    %c0_1 = arith.constant 0 : index
    %1 = vector.load %arg11[%c1, %c0_1] : memref<6x128xf32, #tpu.memory_space<vmem>>, vector<1x32xf32>
    %c2 = arith.constant 2 : index
    %c0_2 = arith.constant 0 : index
    %2 = vector.load %arg11[%c2, %c0_2] : memref<6x128xf32, #tpu.memory_space<vmem>>, vector<1x128xf32>
    %c3 = arith.constant 3 : index
    %c0_3 = arith.constant 0 : index
    %3 = vector.load %arg11[%c3, %c0_3] : memref<6x128xf32, #tpu.memory_space<vmem>>, vector<1x32xf32>
    %c4 = arith.constant 4 : index
    %c0_4 = arith.constant 0 : index
    %4 = vector.load %arg11[%c4, %c0_4] : memref<6x128xf32, #tpu.memory_space<vmem>>, vector<1x16xf32>
    %c5 = arith.constant 5 : index
    %c0_5 = arith.constant 0 : index
    %5 = vector.load %arg11[%c5, %c0_5] : memref<6x128xf32, #tpu.memory_space<vmem>>, vector<1x2xf32>
    %c0_6 = arith.constant 0 : index
    %c0_7 = arith.constant 0 : index
    %6 = vector.load %arg0[%c0_6, %c0_7] : memref<64x4xf32, #tpu.memory_space<vmem>>, vector<64x4xf32>
    %c0_8 = arith.constant 0 : index
    %c0_9 = arith.constant 0 : index
    %7 = vector.load %arg4[%c0_8, %c0_9] : memref<4x16xf32, #tpu.memory_space<vmem>>, vector<4x16xf32>
    %cst = arith.constant dense<0.000000e+00> : vector<64x16xf32>
    %8 = tpu.matmul %6, %7, %cst {dimension_numbers = #tpu.dot_dimension_numbers<[1], [0], [0], [1], [0, 0, 1, 1], [], []>} : vector<64x4xf32>, vector<4x16xf32>, vector<64x16xf32> -> vector<64x16xf32>
    %9 = vector.broadcast %0 : vector<1x16xf32> to vector<64x16xf32>
    %10 = arith.addf %8, %9 : vector<64x16xf32>
    %cst_10 = arith.constant 0.000000e+00 : f32
    %11 = vector.broadcast %cst_10 : f32 to vector<64x16xf32>
    %12 = arith.cmpf oge, %10, %11 : vector<64x16xf32>
    %cst_11 = arith.constant 2.000000e-01 : f32
    %13 = vector.broadcast %cst_11 : f32 to vector<64x16xf32>
    %14 = arith.mulf %13, %10 : vector<64x16xf32>
    %15 = arith.select %12, %10, %14 : vector<64x16xi1>, vector<64x16xf32>
    %c0_12 = arith.constant 0 : index
    %c0_13 = arith.constant 0 : index
    %16 = vector.load %arg5[%c0_12, %c0_13] : memref<16x32xf32, #tpu.memory_space<vmem>>, vector<16x32xf32>
    %cst_14 = arith.constant dense<0.000000e+00> : vector<64x32xf32>
    %17 = tpu.matmul %15, %16, %cst_14 {dimension_numbers = #tpu.dot_dimension_numbers<[1], [0], [0], [1], [0, 0, 1, 1], [], []>} : vector<64x16xf32>, vector<16x32xf32>, vector<64x32xf32> -> vector<64x32xf32>
    %18 = vector.broadcast %1 : vector<1x32xf32> to vector<64x32xf32>
    %19 = arith.addf %17, %18 : vector<64x32xf32>
    %cst_15 = arith.constant 0.000000e+00 : f32
    %20 = vector.broadcast %cst_15 : f32 to vector<64x32xf32>
    %21 = arith.cmpf oge, %19, %20 : vector<64x32xf32>
    %cst_16 = arith.constant 2.000000e-01 : f32
    %22 = vector.broadcast %cst_16 : f32 to vector<64x32xf32>
    %23 = arith.mulf %22, %19 : vector<64x32xf32>
    %24 = arith.select %21, %19, %23 : vector<64x32xi1>, vector<64x32xf32>
    %c0_17 = arith.constant 0 : index
    %c0_18 = arith.constant 0 : index
    %25 = vector.load %arg6[%c0_17, %c0_18] : memref<32x128xf32, #tpu.memory_space<vmem>>, vector<32x128xf32>
    %cst_19 = arith.constant dense<0.000000e+00> : vector<64x128xf32>
    %26 = tpu.matmul %24, %25, %cst_19 {dimension_numbers = #tpu.dot_dimension_numbers<[1], [0], [0], [1], [0, 0, 1, 1], [], []>} : vector<64x32xf32>, vector<32x128xf32>, vector<64x128xf32> -> vector<64x128xf32>
    %27 = vector.broadcast %2 : vector<1x128xf32> to vector<64x128xf32>
    %28 = arith.addf %26, %27 : vector<64x128xf32>
    %c0_20 = arith.constant 0 : index
    %c0_21 = arith.constant 0 : index
    %29 = vector.load %arg13[%c0_20, %c0_21] : memref<64x128xf32, #tpu.memory_space<vmem>>, vector<64x128xf32>
    tpu.vector_store %arg13[%c0_20, %c0_21], %28 {strides = array<i32>} : memref<64x128xf32, #tpu.memory_space<vmem>>, vector<64x128xf32>,
    %c0_22 = arith.constant 0 : index
    %c0_23 = arith.constant 0 : index
    %30 = vector.load %arg8[%c0_22, %c0_23] : memref<40x32xf32, #tpu.memory_space<vmem>>, vector<32x32xf32>
    %c32 = arith.constant 32 : index
    %c0_24 = arith.constant 0 : index
    %31 = vector.load %arg8[%c32, %c0_24] : memref<40x32xf32, #tpu.memory_space<vmem>>, vector<8x32xf32>
    %c0_25 = arith.constant 0 : index
    %c0_26 = arith.constant 0 : index
    %32 = vector.load %arg1[%c0_25, %c0_26] : memref<8x8xf32, #tpu.memory_space<vmem>>, vector<8x8xf32>
    %cst_27 = arith.constant dense<0.000000e+00> : vector<8x32xf32>
    %33 = tpu.matmul %32, %31, %cst_27 {dimension_numbers = #tpu.dot_dimension_numbers<[1], [0], [0], [1], [0, 0, 1, 1], [], []>} : vector<8x8xf32>, vector<8x32xf32>, vector<8x32xf32> -> vector<8x32xf32>
    %34 = vector.broadcast %3 : vector<1x32xf32> to vector<8x32xf32>
    %35 = arith.addf %33, %34 : vector<8x32xf32>
    %c0_28 = arith.constant 0 : index
    %c0_29 = arith.constant 0 : index
    %36 = vector.load %arg7[%c0_28, %c0_29] : memref<32x128xf32, #tpu.memory_space<vmem>>, vector<32x128xf32>
    %c0_30 = arith.constant 0 : index
    %c0_31 = arith.constant 0 : index
    %37 = vector.load %arg2[%c0_30, %c0_31] : memref<8x1xi32, #tpu.memory_space<vmem>>, vector<8x1xi32>
    %cst_32 = arith.constant 0.000000e+00 : f32
    %38 = vector.broadcast %cst_32 : f32 to vector<8x32xf32>
    %cst_33 = arith.constant 0.000000e+00 : f32
    %39 = vector.broadcast %cst_33 : f32 to vector<8x32xf32>
    %cst_34 = arith.constant 0.000000e+00 : f32
    %40 = vector.broadcast %cst_34 : f32 to vector<8x32xf32>
    %c0_35 = arith.constant 0 : index
    %c0_36 = arith.constant 0 : index
    %41 = vector.load %arg13[%c0_35, %c0_36] : memref<64x128xf32, #tpu.memory_space<vmem>>, vector<8x128xf32>
    %cst_37 = arith.constant dense<0.000000e+00> : vector<8x128xf32>
    %42 = tpu.matmul %38, %36, %cst_37 {dimension_numbers = #tpu.dot_dimension_numbers<[1], [0], [0], [1], [0, 0, 1, 1], [], []>} : vector<8x32xf32>, vector<32x128xf32>, vector<8x128xf32> -> vector<8x128xf32>
    %43 = arith.addf %41, %42 : vector<8x128xf32>
    %44 = arith.negf %43 : vector<8x128xf32>
    %45 = math.exp %44 : vector<8x128xf32>
    %cst_38 = arith.constant 1.000000e+00 : f32
    %46 = vector.broadcast %cst_38 : f32 to vector<8x128xf32>
    %47 = arith.addf %46, %45 : vector<8x128xf32>
    %48 = arith.divf %46, %47 : vector<8x128xf32>
    %49 = math.tanh %43 : vector<8x128xf32>
    %50 = vector.extract_strided_slice %48 {offsets = [0, 0], sizes = [8, 32], strides = [1, 1]} : vector<8x128xf32> to vector<8x32xf32>
    %51 = vector.extract_strided_slice %48 {offsets = [0, 32], sizes = [8, 32], strides = [1, 1]} : vector<8x128xf32> to vector<8x32xf32>
    %52 = vector.extract_strided_slice %49 {offsets = [0, 64], sizes = [8, 32], strides = [1, 1]} : vector<8x128xf32> to vector<8x32xf32>
    %53 = vector.extract_strided_slice %48 {offsets = [0, 96], sizes = [8, 32], strides = [1, 1]} : vector<8x128xf32> to vector<8x32xf32>
    %54 = arith.mulf %51, %39 : vector<8x32xf32>
    %55 = arith.mulf %50, %52 : vector<8x32xf32>
    %56 = arith.addf %54, %55 : vector<8x32xf32>
    %57 = math.tanh %56 : vector<8x32xf32>
    %58 = arith.mulf %53, %57 : vector<8x32xf32>
    %c0_i32 = arith.constant 0 : i32
    %59 = vector.broadcast %c0_i32 : i32 to vector<8x1xi32>
    %60 = arith.cmpi eq, %37, %59 : vector<8x1xi32>
    %61 = vector.shape_cast %60 : vector<8x1xi1> to vector<8x1xi1>
    %62 = vector.broadcast %61 : vector<8x1xi1> to vector<8x32xi1>
    %63 = arith.select %62, %58, %40 : vector<8x32xi1>, vector<8x32xf32>
    %c8 = arith.constant 8 : index
    %c0_39 = arith.constant 0 : index
    %64 = vector.load %arg13[%c8, %c0_39] : memref<64x128xf32, #tpu.memory_space<vmem>>, vector<8x128xf32>
    %cst_40 = arith.constant dense<0.000000e+00> : vector<8x128xf32>
    %65 = tpu.matmul %58, %36, %cst_40 {dimension_numbers = #tpu.dot_dimension_numbers<[1], [0], [0], [1], [0, 0, 1, 1], [], []>} : vector<8x32xf32>, vector<32x128xf32>, vector<8x128xf32> -> vector<8x128xf32>
    %66 = arith.addf %64, %65 : vector<8x128xf32>
    %67 = arith.negf %66 : vector<8x128xf32>
    %68 = math.exp %67 : vector<8x128xf32>
    %cst_41 = arith.constant 1.000000e+00 : f32
    %69 = vector.broadcast %cst_41 : f32 to vector<8x128xf32>
    %70 = arith.addf %69, %68 : vector<8x128xf32>
    %71 = arith.divf %69, %70 : vector<8x128xf32>
    %72 = math.tanh %66 : vector<8x128xf32>
    %73 = vector.extract_strided_slice %71 {offsets = [0, 0], sizes = [8, 32], strides = [1, 1]} : vector<8x128xf32> to vector<8x32xf32>
    %74 = vector.extract_strided_slice %71 {offsets = [0, 32], sizes = [8, 32], strides = [1, 1]} : vector<8x128xf32> to vector<8x32xf32>
    %75 = vector.extract_strided_slice %72 {offsets = [0, 64], sizes = [8, 32], strides = [1, 1]} : vector<8x128xf32> to vector<8x32xf32>
    %76 = vector.extract_strided_slice %71 {offsets = [0, 96], sizes = [8, 32], strides = [1, 1]} : vector<8x128xf32> to vector<8x32xf32>
    %77 = arith.mulf %74, %56 : vector<8x32xf32>
    %78 = arith.mulf %73, %75 : vector<8x32xf32>
    %79 = arith.addf %77, %78 : vector<8x32xf32>
    %80 = math.tanh %79 : vector<8x32xf32>
    %81 = arith.mulf %76, %80 : vector<8x32xf32>
    %c1_i32 = arith.constant 1 : i32
    %82 = vector.broadcast %c1_i32 : i32 to vector<8x1xi32>
    %83 = arith.cmpi eq, %37, %82 : vector<8x1xi32>
    %84 = vector.shape_cast %83 : vector<8x1xi1> to vector<8x1xi1>
    %85 = vector.broadcast %84 : vector<8x1xi1> to vector<8x32xi1>
    %86 = arith.select %85, %81, %63 : vector<8x32xi1>, vector<8x32xf32>
    %c16 = arith.constant 16 : index
    %c0_42 = arith.constant 0 : index
    %87 = vector.load %arg13[%c16, %c0_42] : memref<64x128xf32, #tpu.memory_space<vmem>>, vector<8x128xf32>
    %cst_43 = arith.constant dense<0.000000e+00> : vector<8x128xf32>
    %88 = tpu.matmul %81, %36, %cst_43 {dimension_numbers = #tpu.dot_dimension_numbers<[1], [0], [0], [1], [0, 0, 1, 1], [], []>} : vector<8x32xf32>, vector<32x128xf32>, vector<8x128xf32> -> vector<8x128xf32>
    %89 = arith.addf %87, %88 : vector<8x128xf32>
    %90 = arith.negf %89 : vector<8x128xf32>
    %91 = math.exp %90 : vector<8x128xf32>
    %cst_44 = arith.constant 1.000000e+00 : f32
    %92 = vector.broadcast %cst_44 : f32 to vector<8x128xf32>
    %93 = arith.addf %92, %91 : vector<8x128xf32>
    %94 = arith.divf %92, %93 : vector<8x128xf32>
    %95 = math.tanh %89 : vector<8x128xf32>
    %96 = vector.extract_strided_slice %94 {offsets = [0, 0], sizes = [8, 32], strides = [1, 1]} : vector<8x128xf32> to vector<8x32xf32>
    %97 = vector.extract_strided_slice %94 {offsets = [0, 32], sizes = [8, 32], strides = [1, 1]} : vector<8x128xf32> to vector<8x32xf32>
    %98 = vector.extract_strided_slice %95 {offsets = [0, 64], sizes = [8, 32], strides = [1, 1]} : vector<8x128xf32> to vector<8x32xf32>
    %99 = vector.extract_strided_slice %94 {offsets = [0, 96], sizes = [8, 32], strides = [1, 1]} : vector<8x128xf32> to vector<8x32xf32>
    %100 = arith.mulf %97, %79 : vector<8x32xf32>
    %101 = arith.mulf %96, %98 : vector<8x32xf32>
    %102 = arith.addf %100, %101 : vector<8x32xf32>
    %103 = math.tanh %102 : vector<8x32xf32>
    %104 = arith.mulf %99, %103 : vector<8x32xf32>
    %c2_i32 = arith.constant 2 : i32
    %105 = vector.broadcast %c2_i32 : i32 to vector<8x1xi32>
    %106 = arith.cmpi eq, %37, %105 : vector<8x1xi32>
    %107 = vector.shape_cast %106 : vector<8x1xi1> to vector<8x1xi1>
    %108 = vector.broadcast %107 : vector<8x1xi1> to vector<8x32xi1>
    %109 = arith.select %108, %104, %86 : vector<8x32xi1>, vector<8x32xf32>
    %c24 = arith.constant 24 : index
    %c0_45 = arith.constant 0 : index
    %110 = vector.load %arg13[%c24, %c0_45] : memref<64x128xf32, #tpu.memory_space<vmem>>, vector<8x128xf32>
    %cst_46 = arith.constant dense<0.000000e+00> : vector<8x128xf32>
    %111 = tpu.matmul %104, %36, %cst_46 {dimension_numbers = #tpu.dot_dimension_numbers<[1], [0], [0], [1], [0, 0, 1, 1], [], []>} : vector<8x32xf32>, vector<32x128xf32>, vector<8x128xf32> -> vector<8x128xf32>
    %112 = arith.addf %110, %111 : vector<8x128xf32>
    %113 = arith.negf %112 : vector<8x128xf32>
    %114 = math.exp %113 : vector<8x128xf32>
    %cst_47 = arith.constant 1.000000e+00 : f32
    %115 = vector.broadcast %cst_47 : f32 to vector<8x128xf32>
    %116 = arith.addf %115, %114 : vector<8x128xf32>
    %117 = arith.divf %115, %116 : vector<8x128xf32>
    %118 = math.tanh %112 : vector<8x128xf32>
    %119 = vector.extract_strided_slice %117 {offsets = [0, 0], sizes = [8, 32], strides = [1, 1]} : vector<8x128xf32> to vector<8x32xf32>
    %120 = vector.extract_strided_slice %117 {offsets = [0, 32], sizes = [8, 32], strides = [1, 1]} : vector<8x128xf32> to vector<8x32xf32>
    %121 = vector.extract_strided_slice %118 {offsets = [0, 64], sizes = [8, 32], strides = [1, 1]} : vector<8x128xf32> to vector<8x32xf32>
    %122 = vector.extract_strided_slice %117 {offsets = [0, 96], sizes = [8, 32], strides = [1, 1]} : vector<8x128xf32> to vector<8x32xf32>
    %123 = arith.mulf %120, %102 : vector<8x32xf32>
    %124 = arith.mulf %119, %121 : vector<8x32xf32>
    %125 = arith.addf %123, %124 : vector<8x32xf32>
    %126 = math.tanh %125 : vector<8x32xf32>
    %127 = arith.mulf %122, %126 : vector<8x32xf32>
    %c3_i32 = arith.constant 3 : i32
    %128 = vector.broadcast %c3_i32 : i32 to vector<8x1xi32>
    %129 = arith.cmpi eq, %37, %128 : vector<8x1xi32>
    %130 = vector.shape_cast %129 : vector<8x1xi1> to vector<8x1xi1>
    %131 = vector.broadcast %130 : vector<8x1xi1> to vector<8x32xi1>
    %132 = arith.select %131, %127, %109 : vector<8x32xi1>, vector<8x32xf32>
    %c32_48 = arith.constant 32 : index
    %c0_49 = arith.constant 0 : index
    %133 = vector.load %arg13[%c32_48, %c0_49] : memref<64x128xf32, #tpu.memory_space<vmem>>, vector<8x128xf32>
    %cst_50 = arith.constant dense<0.000000e+00> : vector<8x128xf32>
    %134 = tpu.matmul %127, %36, %cst_50 {dimension_numbers = #tpu.dot_dimension_numbers<[1], [0], [0], [1], [0, 0, 1, 1], [], []>} : vector<8x32xf32>, vector<32x128xf32>, vector<8x128xf32> -> vector<8x128xf32>
    %135 = arith.addf %133, %134 : vector<8x128xf32>
    %136 = arith.negf %135 : vector<8x128xf32>
    %137 = math.exp %136 : vector<8x128xf32>
    %cst_51 = arith.constant 1.000000e+00 : f32
    %138 = vector.broadcast %cst_51 : f32 to vector<8x128xf32>
    %139 = arith.addf %138, %137 : vector<8x128xf32>
    %140 = arith.divf %138, %139 : vector<8x128xf32>
    %141 = math.tanh %135 : vector<8x128xf32>
    %142 = vector.extract_strided_slice %140 {offsets = [0, 0], sizes = [8, 32], strides = [1, 1]} : vector<8x128xf32> to vector<8x32xf32>
    %143 = vector.extract_strided_slice %140 {offsets = [0, 32], sizes = [8, 32], strides = [1, 1]} : vector<8x128xf32> to vector<8x32xf32>
    %144 = vector.extract_strided_slice %141 {offsets = [0, 64], sizes = [8, 32], strides = [1, 1]} : vector<8x128xf32> to vector<8x32xf32>
    %145 = vector.extract_strided_slice %140 {offsets = [0, 96], sizes = [8, 32], strides = [1, 1]} : vector<8x128xf32> to vector<8x32xf32>
    %146 = arith.mulf %143, %125 : vector<8x32xf32>
    %147 = arith.mulf %142, %144 : vector<8x32xf32>
    %148 = arith.addf %146, %147 : vector<8x32xf32>
    %149 = math.tanh %148 : vector<8x32xf32>
    %150 = arith.mulf %145, %149 : vector<8x32xf32>
    %c4_i32 = arith.constant 4 : i32
    %151 = vector.broadcast %c4_i32 : i32 to vector<8x1xi32>
    %152 = arith.cmpi eq, %37, %151 : vector<8x1xi32>
    %153 = vector.shape_cast %152 : vector<8x1xi1> to vector<8x1xi1>
    %154 = vector.broadcast %153 : vector<8x1xi1> to vector<8x32xi1>
    %155 = arith.select %154, %150, %132 : vector<8x32xi1>, vector<8x32xf32>
    %c40 = arith.constant 40 : index
    %c0_52 = arith.constant 0 : index
    %156 = vector.load %arg13[%c40, %c0_52] : memref<64x128xf32, #tpu.memory_space<vmem>>, vector<8x128xf32>
    %cst_53 = arith.constant dense<0.000000e+00> : vector<8x128xf32>
    %157 = tpu.matmul %150, %36, %cst_53 {dimension_numbers = #tpu.dot_dimension_numbers<[1], [0], [0], [1], [0, 0, 1, 1], [], []>} : vector<8x32xf32>, vector<32x128xf32>, vector<8x128xf32> -> vector<8x128xf32>
    %158 = arith.addf %156, %157 : vector<8x128xf32>
    %159 = arith.negf %158 : vector<8x128xf32>
    %160 = math.exp %159 : vector<8x128xf32>
    %cst_54 = arith.constant 1.000000e+00 : f32
    %161 = vector.broadcast %cst_54 : f32 to vector<8x128xf32>
    %162 = arith.addf %161, %160 : vector<8x128xf32>
    %163 = arith.divf %161, %162 : vector<8x128xf32>
    %164 = math.tanh %158 : vector<8x128xf32>
    %165 = vector.extract_strided_slice %163 {offsets = [0, 0], sizes = [8, 32], strides = [1, 1]} : vector<8x128xf32> to vector<8x32xf32>
    %166 = vector.extract_strided_slice %163 {offsets = [0, 32], sizes = [8, 32], strides = [1, 1]} : vector<8x128xf32> to vector<8x32xf32>
    %167 = vector.extract_strided_slice %164 {offsets = [0, 64], sizes = [8, 32], strides = [1, 1]} : vector<8x128xf32> to vector<8x32xf32>
    %168 = vector.extract_strided_slice %163 {offsets = [0, 96], sizes = [8, 32], strides = [1, 1]} : vector<8x128xf32> to vector<8x32xf32>
    %169 = arith.mulf %166, %148 : vector<8x32xf32>
    %170 = arith.mulf %165, %167 : vector<8x32xf32>
    %171 = arith.addf %169, %170 : vector<8x32xf32>
    %172 = math.tanh %171 : vector<8x32xf32>
    %173 = arith.mulf %168, %172 : vector<8x32xf32>
    %c5_i32 = arith.constant 5 : i32
    %174 = vector.broadcast %c5_i32 : i32 to vector<8x1xi32>
    %175 = arith.cmpi eq, %37, %174 : vector<8x1xi32>
    %176 = vector.shape_cast %175 : vector<8x1xi1> to vector<8x1xi1>
    %177 = vector.broadcast %176 : vector<8x1xi1> to vector<8x32xi1>
    %178 = arith.select %177, %173, %155 : vector<8x32xi1>, vector<8x32xf32>
    %c48 = arith.constant 48 : index
    %c0_55 = arith.constant 0 : index
    %179 = vector.load %arg13[%c48, %c0_55] : memref<64x128xf32, #tpu.memory_space<vmem>>, vector<8x128xf32>
    %cst_56 = arith.constant dense<0.000000e+00> : vector<8x128xf32>
    %180 = tpu.matmul %173, %36, %cst_56 {dimension_numbers = #tpu.dot_dimension_numbers<[1], [0], [0], [1], [0, 0, 1, 1], [], []>} : vector<8x32xf32>, vector<32x128xf32>, vector<8x128xf32> -> vector<8x128xf32>
    %181 = arith.addf %179, %180 : vector<8x128xf32>
    %182 = arith.negf %181 : vector<8x128xf32>
    %183 = math.exp %182 : vector<8x128xf32>
    %cst_57 = arith.constant 1.000000e+00 : f32
    %184 = vector.broadcast %cst_57 : f32 to vector<8x128xf32>
    %185 = arith.addf %184, %183 : vector<8x128xf32>
    %186 = arith.divf %184, %185 : vector<8x128xf32>
    %187 = math.tanh %181 : vector<8x128xf32>
    %188 = vector.extract_strided_slice %186 {offsets = [0, 0], sizes = [8, 32], strides = [1, 1]} : vector<8x128xf32> to vector<8x32xf32>
    %189 = vector.extract_strided_slice %186 {offsets = [0, 32], sizes = [8, 32], strides = [1, 1]} : vector<8x128xf32> to vector<8x32xf32>
    %190 = vector.extract_strided_slice %187 {offsets = [0, 64], sizes = [8, 32], strides = [1, 1]} : vector<8x128xf32> to vector<8x32xf32>
    %191 = vector.extract_strided_slice %186 {offsets = [0, 96], sizes = [8, 32], strides = [1, 1]} : vector<8x128xf32> to vector<8x32xf32>
    %192 = arith.mulf %189, %171 : vector<8x32xf32>
    %193 = arith.mulf %188, %190 : vector<8x32xf32>
    %194 = arith.addf %192, %193 : vector<8x32xf32>
    %195 = math.tanh %194 : vector<8x32xf32>
    %196 = arith.mulf %191, %195 : vector<8x32xf32>
    %c6_i32 = arith.constant 6 : i32
    %197 = vector.broadcast %c6_i32 : i32 to vector<8x1xi32>
    %198 = arith.cmpi eq, %37, %197 : vector<8x1xi32>
    %199 = vector.shape_cast %198 : vector<8x1xi1> to vector<8x1xi1>
    %200 = vector.broadcast %199 : vector<8x1xi1> to vector<8x32xi1>
    %201 = arith.select %200, %196, %178 : vector<8x32xi1>, vector<8x32xf32>
    %c56 = arith.constant 56 : index
    %c0_58 = arith.constant 0 : index
    %202 = vector.load %arg13[%c56, %c0_58] : memref<64x128xf32, #tpu.memory_space<vmem>>, vector<8x128xf32>
    %cst_59 = arith.constant dense<0.000000e+00> : vector<8x128xf32>
    %203 = tpu.matmul %196, %36, %cst_59 {dimension_numbers = #tpu.dot_dimension_numbers<[1], [0], [0], [1], [0, 0, 1, 1], [], []>} : vector<8x32xf32>, vector<32x128xf32>, vector<8x128xf32> -> vector<8x128xf32>
    %204 = arith.addf %202, %203 : vector<8x128xf32>
    %205 = arith.negf %204 : vector<8x128xf32>
    %206 = math.exp %205 : vector<8x128xf32>
    %cst_60 = arith.constant 1.000000e+00 : f32
    %207 = vector.broadcast %cst_60 : f32 to vector<8x128xf32>
    %208 = arith.addf %207, %206 : vector<8x128xf32>
    %209 = arith.divf %207, %208 : vector<8x128xf32>
    %210 = math.tanh %204 : vector<8x128xf32>
    %211 = vector.extract_strided_slice %209 {offsets = [0, 0], sizes = [8, 32], strides = [1, 1]} : vector<8x128xf32> to vector<8x32xf32>
    %212 = vector.extract_strided_slice %209 {offsets = [0, 32], sizes = [8, 32], strides = [1, 1]} : vector<8x128xf32> to vector<8x32xf32>
    %213 = vector.extract_strided_slice %210 {offsets = [0, 64], sizes = [8, 32], strides = [1, 1]} : vector<8x128xf32> to vector<8x32xf32>
    %214 = vector.extract_strided_slice %209 {offsets = [0, 96], sizes = [8, 32], strides = [1, 1]} : vector<8x128xf32> to vector<8x32xf32>
    %215 = arith.mulf %212, %194 : vector<8x32xf32>
    %216 = arith.mulf %211, %213 : vector<8x32xf32>
    %217 = arith.addf %215, %216 : vector<8x32xf32>
    %218 = math.tanh %217 : vector<8x32xf32>
    %219 = arith.mulf %214, %218 : vector<8x32xf32>
    %c7_i32 = arith.constant 7 : i32
    %220 = vector.broadcast %c7_i32 : i32 to vector<8x1xi32>
    %221 = arith.cmpi eq, %37, %220 : vector<8x1xi32>
    %222 = vector.shape_cast %221 : vector<8x1xi1> to vector<8x1xi1>
    %223 = vector.broadcast %222 : vector<8x1xi1> to vector<8x32xi1>
    %224 = arith.select %223, %219, %201 : vector<8x32xi1>, vector<8x32xf32>
    %cst_61 = arith.constant dense<0.000000e+00> : vector<8x32xf32>
    %225 = tpu.matmul %224, %30, %cst_61 {dimension_numbers = #tpu.dot_dimension_numbers<[1], [0], [0], [1], [0, 0, 1, 1], [], []>} : vector<8x32xf32>, vector<32x32xf32>, vector<8x32xf32> -> vector<8x32xf32>
    %226 = arith.addf %225, %35 : vector<8x32xf32>
    %cst_62 = arith.constant 0.000000e+00 : f32
    %227 = vector.broadcast %cst_62 : f32 to vector<8x32xf32>
    %228 = arith.cmpf oge, %226, %227 : vector<8x32xf32>
    %cst_63 = arith.constant 2.000000e-01 : f32
    %229 = vector.broadcast %cst_63 : f32 to vector<8x32xf32>
    %230 = arith.mulf %229, %226 : vector<8x32xf32>
    %231 = arith.select %228, %226, %230 : vector<8x32xi1>, vector<8x32xf32>
    %c0_64 = arith.constant 0 : index
    %c0_65 = arith.constant 0 : index
    %232 = vector.load %arg9[%c0_64, %c0_65] : memref<32x16xf32, #tpu.memory_space<vmem>>, vector<32x16xf32>
    %cst_66 = arith.constant dense<0.000000e+00> : vector<8x16xf32>
    %233 = tpu.matmul %231, %232, %cst_66 {dimension_numbers = #tpu.dot_dimension_numbers<[1], [0], [0], [1], [0, 0, 1, 1], [], []>} : vector<8x32xf32>, vector<32x16xf32>, vector<8x16xf32> -> vector<8x16xf32>
    %234 = vector.broadcast %4 : vector<1x16xf32> to vector<8x16xf32>
    %235 = arith.addf %233, %234 : vector<8x16xf32>
    %cst_67 = arith.constant 0.000000e+00 : f32
    %236 = vector.broadcast %cst_67 : f32 to vector<8x16xf32>
    %237 = arith.cmpf oge, %235, %236 : vector<8x16xf32>
    %cst_68 = arith.constant 2.000000e-01 : f32
    %238 = vector.broadcast %cst_68 : f32 to vector<8x16xf32>
    %239 = arith.mulf %238, %235 : vector<8x16xf32>
    %240 = arith.select %237, %235, %239 : vector<8x16xi1>, vector<8x16xf32>
    %c0_69 = arith.constant 0 : index
    %c0_70 = arith.constant 0 : index
    %241 = vector.load %arg10[%c0_69, %c0_70] : memref<16x2xf32, #tpu.memory_space<vmem>>, vector<16x2xf32>
    %cst_71 = arith.constant dense<0.000000e+00> : vector<8x2xf32>
    %242 = tpu.matmul %240, %241, %cst_71 {dimension_numbers = #tpu.dot_dimension_numbers<[1], [0], [0], [1], [0, 0, 1, 1], [], []>} : vector<8x16xf32>, vector<16x2xf32>, vector<8x2xf32> -> vector<8x2xf32>
    %243 = vector.broadcast %5 : vector<1x2xf32> to vector<8x2xf32>
    %244 = arith.addf %242, %243 : vector<8x2xf32>
    %c0_72 = arith.constant 0 : index
    %c0_73 = arith.constant 0 : index
    %245 = vector.load %arg3[%c0_72, %c0_73] : memref<8x2xf32, #tpu.memory_space<vmem>>, vector<8x2xf32>
    %246 = arith.addf %244, %245 : vector<8x2xf32>
    %c0_74 = arith.constant 0 : index
    %c0_75 = arith.constant 0 : index
    %247 = vector.load %arg12[%c0_74, %c0_75] : memref<8x2xf32, #tpu.memory_space<vmem>>, vector<8x2xf32>
    tpu.vector_store %arg12[%c0_74, %c0_75], %246 {strides = array<i32>} : memref<8x2xf32, #tpu.memory_space<vmem>>, vector<8x2xf32>,
    return
  }
}

</mosaic_0001>

<llo_original>
// kernel: generator_forward.1
$region0: #{generator_forward.1}
  #allocation0 [shape = 'u32[]', space=smem, size = 0x4, offset = 0x4, fixed_abs, tag = 'smem constant byte address 0x4 - core index']
  #allocation1 [shape = 'u32[144,128]{1,0:T(1,128)}', space=vmem, size = 0x12000, scoped, tag = 'internal scratch']
  #allocation2 [shape = 'f32[64,128]{1,0:T(8,128)}', space=vmem, size = 0x8000, scoped, tag = 'scratch operand']
  %s0 = inlined_call_operand.vmem [shape: f32[64,4], index: 0, kind: input, shape index: {}]
  %s1 = inlined_call_operand.vmem [shape: f32[8,8], index: 1, kind: input, shape index: {}]
  %s2 = inlined_call_operand.vmem [shape: s32[8,1], index: 2, kind: input, shape index: {}]
  %s3 = inlined_call_operand.vmem [shape: f32[8,2], index: 3, kind: input, shape index: {}]
  %s4 = inlined_call_operand.vmem [shape: f32[4,16], index: 4, kind: input, shape index: {}]
  %s5 = inlined_call_operand.vmem [shape: f32[16,32], index: 5, kind: input, shape index: {}]
  %s6 = inlined_call_operand.vmem [shape: f32[32,128], index: 6, kind: input, shape index: {}]
  %s7 = inlined_call_operand.vmem [shape: f32[32,128], index: 7, kind: input, shape index: {}]
  %s8 = inlined_call_operand.vmem [shape: f32[40,32], index: 8, kind: input, shape index: {}]
  %s9 = inlined_call_operand.vmem [shape: f32[32,16], index: 9, kind: input, shape index: {}]
  %s10 = inlined_call_operand.vmem [shape: f32[16,2], index: 10, kind: input, shape index: {}]
  %s11 = inlined_call_operand.vmem [shape: f32[6,128], index: 11, kind: input, shape index: {}]
  %s12 = inlined_call_operand.vmem [shape: f32[8,2], index: 12, kind: output, shape index: {}]
  %s13 = sld [smem:[#allocation0]]
  $region58: #{generator_forward.1} parent=0
    _
  %s15 = ssub.s32 1, %s13
  %s16 = scalar_select 0, %s15, %s13
  // Predicated region
  $region2: #{generator_forward.1} parent=0 // pred_check
    _
  $region3: #{generator_forward.1} parent=0 // pred_check_branch
    %18 = sbr.rel (0) target = $region5
  $region4: #{generator_forward.1} parent=0 // pred_region
    _
  $region5: #{generator_forward.1} parent=0 // pred_fallthru
    _
  // Predicated region
  $region6: #{generator_forward.1} parent=0 // pred_check
    _
  $region7: #{generator_forward.1} parent=0 // pred_check_branch
    %20 = sbr.rel (0) target = $region9
  $region8: #{generator_forward.1} parent=0 // pred_region
    _
  $region9: #{generator_forward.1} parent=0 // pred_fallthru
    _
  // Predicated region
  $region10: #{generator_forward.1} parent=0 // pred_check
    _
  $region11: #{generator_forward.1} parent=0 // pred_check_branch
    %22 = sbr.rel (0) target = $region13
  $region12: #{generator_forward.1} parent=0 // pred_region
    _
  $region13: #{generator_forward.1} parent=0 // pred_fallthru
    _
  // Predicated region
  $region14: #{generator_forward.1} parent=0 // pred_check
    _
  $region15: #{generator_forward.1} parent=0 // pred_check_branch
    %24 = sbr.rel (0) target = $region17
  $region16: #{generator_forward.1} parent=0 // pred_region
    _
  $region17: #{generator_forward.1} parent=0 // pred_fallthru
    _
  // Predicated region
  $region18: #{generator_forward.1} parent=0 // pred_check
    _
  $region19: #{generator_forward.1} parent=0 // pred_check_branch
    %26 = sbr.rel (0) target = $region21
  $region20: #{generator_forward.1} parent=0 // pred_region
    _
  $region21: #{generator_forward.1} parent=0 // pred_fallthru
    _
  // Predicated region
  $region22: #{generator_forward.1} parent=0 // pred_check
    _
  $region23: #{generator_forward.1} parent=0 // pred_check_branch
    %28 = sbr.rel (0) target = $region25
  $region24: #{generator_forward.1} parent=0 // pred_region
    _
  $region25: #{generator_forward.1} parent=0 // pred_fallthru
    _
  // Predicated region
  $region26: #{generator_forward.1} parent=0 // pred_check
    _
  $region27: #{generator_forward.1} parent=0 // pred_check_branch
    %30 = sbr.rel (0) target = $region29
  $region28: #{generator_forward.1} parent=0 // pred_region
    _
  $region29: #{generator_forward.1} parent=0 // pred_fallthru
    _
  // Predicated region
  $region30: #{generator_forward.1} parent=0 // pred_check
    _
  $region31: #{generator_forward.1} parent=0 // pred_check_branch
    %32 = sbr.rel (0) target = $region33
  $region32: #{generator_forward.1} parent=0 // pred_region
    _
  $region33: #{generator_forward.1} parent=0 // pred_fallthru
    _
  // Predicated region
  $region34: #{generator_forward.1} parent=0 // pred_check
    _
  $region35: #{generator_forward.1} parent=0 // pred_check_branch
    %34 = sbr.rel (0) target = $region37
  $region36: #{generator_forward.1} parent=0 // pred_region
    _
  $region37: #{generator_forward.1} parent=0 // pred_fallthru
    _
  // Predicated region
  $region38: #{generator_forward.1} parent=0 // pred_check
    _
  $region39: #{generator_forward.1} parent=0 // pred_check_branch
    %36 = sbr.rel (0) target = $region41
  $region40: #{generator_forward.1} parent=0 // pred_region
    _
  $region41: #{generator_forward.1} parent=0 // pred_fallthru
    _
  // Predicated region
  $region42: #{generator_forward.1} parent=0 // pred_check
    _
  $region43: #{generator_forward.1} parent=0 // pred_check_branch
    %38 = sbr.rel (0) target = $region45
  $region44: #{generator_forward.1} parent=0 // pred_region
    _
  $region45: #{generator_forward.1} parent=0 // pred_fallthru
    _
  // Predicated region
  $region46: #{generator_forward.1} parent=0 // pred_check
    _
  $region47: #{generator_forward.1} parent=0 // pred_check_branch
    %40 = sbr.rel (0) target = $region49
  $region48: #{generator_forward.1} parent=0 // pred_region
    _
  $region49: #{generator_forward.1} parent=0 // pred_fallthru
    _
  %v41 = vld [vmem:[%s11] sm:$0x1]
  %v42 = vld [vmem:[%s11 + $0x1] sm:$0x1]
  %v43 = vld [vmem:[%s11 + $0x2] sm:$0x1]
  %v44 = vld [vmem:[%s11 + $0x3] sm:$0x1]
  %v45 = vld [vmem:[%s11 + $0x4] sm:$0x1]
  %v46 = vld [vmem:[%s11 + $0x5] sm:$0x1]
  %v47 = vld [vmem:[%s0] sm:$0xff]
  %v48 = vld [vmem:[%s0 + $0x8] sm:$0xff]
  %v49 = vld [vmem:[%s0 + $0x10] sm:$0xff]
  %v50 = vld [vmem:[%s0 + $0x18] sm:$0xff]
  %v51 = vld [vmem:[%s0 + $0x20] sm:$0xff]
  %v52 = vld [vmem:[%s0 + $0x28] sm:$0xff]
  %v53 = vld [vmem:[%s0 + $0x30] sm:$0xff]
  %v54 = vld [vmem:[%s0 + $0x38] sm:$0xff]
  %v55 = vld [vmem:[%s4] sm:$0xf]
  %v56 = vlaneseq
  %v57 = vshrl.u32 %v56, 7
  %v58 = vsub.s32 0, %v57
  %v59 = vrot.slane %v41, %v58
  %vm60 = vcmask 31744
  %v62 = vsel %vm60, %v47, 0
  %v65 = vsel %vm60, %v48, 0
  %v68 = vsel %vm60, %v49, 0
  %v71 = vsel %vm60, %v50, 0
  %v74 = vsel %vm60, %v51, 0
  %v77 = vsel %vm60, %v52, 0
  %v80 = vsel %vm60, %v53, 0
  %v83 = vsel %vm60, %v54, 0
  %vm85 = vcmask 1043456
  %v87 = vsel %vm85, %v55, 0
  %89 = vmatprep.subr.mxu0 0.0
  %90 = vmatpush1.msra.mxu0 %v87
  %91 = vmatprep.subr.mxu0 0.0
  %92 = vmatpush1.msra.mxu0 0.0
  %93 = vmatprep.subr.mxu0 0.0
  %94 = vmatpush1.msra.mxu0 0.0
  %95 = vmatprep.subr.mxu0 0.0
  %96 = vmatpush1.msra.mxu0 0.0
  %97 = vmatprep.subr.mxu0 0.0
  %98 = vmatpush1.msra.mxu0 0.0
  %99 = vmatprep.subr.mxu0 0.0
  %100 = vmatpush1.msra.mxu0 0.0
  %101 = vmatprep.subr.mxu0 0.0
  %102 = vmatpush1.msra.mxu0 0.0
  %103 = vmatprep.subr.mxu0 0.0
  %104 = vmatpush1.msra.mxu0 0.0
  %105 = vmatprep.subr.mxu0 0.0
  %106 = vmatpush1.msra.mxu0 0.0
  %107 = vmatprep.subr.mxu0 0.0
  %108 = vmatpush1.msra.mxu0 0.0
  %109 = vmatprep.subr.mxu0 0.0
  %110 = vmatpush1.msra.mxu0 0.0
  %111 = vmatprep.subr.mxu0 0.0
  %112 = vmatpush1.msra.mxu0 0.0
  %113 = vmatprep.subr.mxu0 0.0
  %114 = vmatpush1.msra.mxu0 0.0
  %115 = vmatprep.subr.mxu0 0.0
  %116 = vmatpush1.msra.mxu0 0.0
  %117 = vmatprep.subr.mxu0 0.0
  %118 = vmatpush1.msra.mxu0 0.0
  %119 = vmatprep.subr.mxu0 0.0
  %120 = vmatpush1.msra.mxu0 0.0
  %121 = vmatprep.subr.mxu0 0.0
  %122 = vmatpush1.msra.mxu0 0.0
  %123 = vmatprep.subr.mxu0 0.0
  %124 = vmatpush1.msra.mxu0 0.0
  %125 = vmatprep.subr.mxu0 0.0
  %126 = vmatpush1.msra.mxu0 0.0
  %127 = vmatprep.subr.mxu0 0.0
  %128 = vmatpush1.msra.mxu0 0.0
  %129 = vmatprep.subr.mxu0 0.0
  %130 = vmatpush1.msra.mxu0 0.0
  %131 = vmatprep.subr.mxu0 0.0
  %132 = vmatpush1.msra.mxu0 0.0
  %133 = vmatprep.subr.mxu0 0.0
  %134 = vmatpush1.msra.mxu0 0.0
  %135 = vmatprep.subr.mxu0 0.0
  %136 = vmatpush1.msra.mxu0 0.0
  %137 = vmatprep.subr.mxu0 0.0
  %138 = vmatpush1.msra.mxu0 0.0
  %139 = vmatprep.subr.mxu0 0.0
  %140 = vmatpush1.msra.mxu0 0.0
  %141 = vmatprep.subr.mxu0 0.0
  %142 = vmatpush1.msra.mxu0 0.0
  %143 = vmatprep.subr.mxu0 0.0
  %144 = vmatpush1.msra.mxu0 0.0
  %145 = vmatprep.subr.mxu0 0.0
  %146 = vmatpush1.msra.mxu0 0.0
  %147 = vmatprep.subr.mxu0 0.0
  %148 = vmatpush1.msra.mxu0 0.0
  %149 = vmatprep.subr.mxu0 0.0
  %150 = vmatpush1.msra.mxu0 0.0
  %151 = vmatprep.subr.mxu0 0.0
  %152 = vmatpush1.msra.mxu0 0.0
  %153 = vmatprep.mubr.f32.mxu0 0.0
  %154 = vmatmul.mubr.f32.gmra.mrb[0].mxu0 %v62
  %v155 = vpop.f32.mrb[0].mxu0
  %v156 = vadd.f32 %v59, %v155
  %v157 = vpop.f32.mrb[0].mxu0
  %158 = vmatprep.mubr.f32.mxu0 0.0
  %159 = vmatmul.mubr.f32.gmra.mrb[0].mxu0 %v65
  %v160 = vpop.f32.mrb[0].mxu0
  %v161 = vadd.f32 %v59, %v160
  %v162 = vpop.f32.mrb[0].mxu0
  %163 = vmatprep.mubr.f32.mxu0 0.0
  %164 = vmatmul.mubr.f32.gmra.mrb[0].mxu0 %v68
  %v165 = vpop.f32.mrb[0].mxu0
  %v166 = vadd.f32 %v59, %v165
  %v167 = vpop.f32.mrb[0].mxu0
  %168 = vmatprep.mubr.f32.mxu0 0.0
  %169 = vmatmul.mubr.f32.gmra.mrb[0].mxu0 %v71
  %v170 = vpop.f32.mrb[0].mxu0
  %v171 = vadd.f32 %v59, %v170
  %v172 = vpop.f32.mrb[0].mxu0
  %173 = vmatprep.mubr.f32.mxu0 0.0
  %174 = vmatmul.mubr.f32.gmra.mrb[0].mxu0 %v74
  %v175 = vpop.f32.mrb[0].mxu0
  %v176 = vadd.f32 %v59, %v175
  %v177 = vpop.f32.mrb[0].mxu0
  %178 = vmatprep.mubr.f32.mxu0 0.0
  %179 = vmatmul.mubr.f32.gmra.mrb[0].mxu0 %v77
  %v180 = vpop.f32.mrb[0].mxu0
  %v181 = vadd.f32 %v59, %v180
  %v182 = vpop.f32.mrb[0].mxu0
  %183 = vmatprep.mubr.f32.mxu0 0.0
  %184 = vmatmul.mubr.f32.gmra.mrb[0].mxu0 %v80
  %v185 = vpop.f32.mrb[0].mxu0
  %v186 = vadd.f32 %v59, %v185
  %v187 = vpop.f32.mrb[0].mxu0
  %188 = vmatprep.mubr.f32.mxu0 0.0
  %189 = vmatmul.mubr.f32.gmra.mrb[0].mxu0 %v83
  %v190 = vpop.f32.mrb[0].mxu0
  %v191 = vadd.f32 %v59, %v190
  %v192 = vpop.f32.mrb[0].mxu0
  %193 = vdwg.mxu0
  %vm194 = vcmp.ge.f32.partialorder %v156, 0.0
  %vm195 = vcmp.ge.f32.partialorder %v161, 0.0
  %vm196 = vcmp.ge.f32.partialorder %v166, 0.0
  %vm197 = vcmp.ge.f32.partialorder %v171, 0.0
  %vm198 = vcmp.ge.f32.partialorder %v176, 0.0
  %vm199 = vcmp.ge.f32.partialorder %v181, 0.0
  %vm200 = vcmp.ge.f32.partialorder %v186, 0.0
  %vm201 = vcmp.ge.f32.partialorder %v191, 0.0
  %v202 = vmul.f32 %v156, 0.2
  %v203 = vmul.f32 %v161, 0.2
  %v204 = vmul.f32 %v166, 0.2
  %v205 = vmul.f32 %v171, 0.2
  %v206 = vmul.f32 %v176, 0.2
  %v207 = vmul.f32 %v181, 0.2
  %v208 = vmul.f32 %v186, 0.2
  %v209 = vmul.f32 %v191, 0.2
  %v210 = vsel %vm194, %v156, %v202
  %v211 = vsel %vm195, %v161, %v203
  %v212 = vsel %vm196, %v166, %v204
  %v213 = vsel %vm197, %v171, %v205
  %v214 = vsel %vm198, %v176, %v206
  %v215 = vsel %vm199, %v181, %v207
  %v216 = vsel %vm200, %v186, %v208
  %v217 = vsel %vm201, %v191, %v209
  %v218 = vld [vmem:[%s5] sm:$0xff]
  %v219 = vld [vmem:[%s5 + $0x8] sm:$0xff]
  %v220 = vlaneseq
  %v221 = vshrl.u32 %v220, 7
  %v222 = vsub.s32 0, %v221
  %v223 = vrot.slane %v42, %v222
  %vm224 = vcmask 130048
  %v226 = vsel %vm224, %v210, 0
  %v229 = vsel %vm224, %v211, 0
  %v232 = vsel %vm224, %v212, 0
  %v235 = vsel %vm224, %v213, 0
  %v238 = vsel %vm224, %v214, 0
  %v241 = vsel %vm224, %v215, 0
  %v244 = vsel %vm224, %v216, 0
  %v247 = vsel %vm224, %v217, 0
  %249 = vmatprep.subr.mxu0 0.0
  %250 = vmatpush1.msra.mxu0 %v218
  %251 = vmatprep.subr.mxu0 0.0
  %252 = vmatpush1.msra.mxu0 %v219
  %253 = vmatprep.subr.mxu0 0.0
  %254 = vmatpush1.msra.mxu0 0.0
  %255 = vmatprep.subr.mxu0 0.0
  %256 = vmatpush1.msra.mxu0 0.0
  %257 = vmatprep.subr.mxu0 0.0
  %258 = vmatpush1.msra.mxu0 0.0
  %259 = vmatprep.subr.mxu0 0.0
  %260 = vmatpush1.msra.mxu0 0.0
  %261 = vmatprep.subr.mxu0 0.0
  %262 = vmatpush1.msra.mxu0 0.0
  %263 = vmatprep.subr.mxu0 0.0
  %264 = vmatpush1.msra.mxu0 0.0
  %265 = vmatprep.subr.mxu0 0.0
  %266 = vmatpush1.msra.mxu0 0.0
  %267 = vmatprep.subr.mxu0 0.0
  %268 = vmatpush1.msra.mxu0 0.0
  %269 = vmatprep.subr.mxu0 0.0
  %270 = vmatpush1.msra.mxu0 0.0
  %271 = vmatprep.subr.mxu0 0.0
  %272 = vmatpush1.msra.mxu0 0.0
  %273 = vmatprep.subr.mxu0 0.0
  %274 = vmatpush1.msra.mxu0 0.0
  %275 = vmatprep.subr.mxu0 0.0
  %276 = vmatpush1.msra.mxu0 0.0
  %277 = vmatprep.subr.mxu0 0.0
  %278 = vmatpush1.msra.mxu0 0.0
  %279 = vmatprep.subr.mxu0 0.0
  %280 = vmatpush1.msra.mxu0 0.0
  %281 = vmatprep.subr.mxu0 0.0
  %282 = vmatpush1.msra.mxu0 0.0
  %283 = vmatprep.subr.mxu0 0.0
  %284 = vmatpush1.msra.mxu0 0.0
  %285 = vmatprep.subr.mxu0 0.0
  %286 = vmatpush1.msra.mxu0 0.0
  %287 = vmatprep.subr.mxu0 0.0
  %288 = vmatpush1.msra.mxu0 0.0
  %289 = vmatprep.subr.mxu0 0.0
  %290 = vmatpush1.msra.mxu0 0.0
  %291 = vmatprep.subr.mxu0 0.0
  %292 = vmatpush1.msra.mxu0 0.0
  %293 = vmatprep.subr.mxu0 0.0
  %294 = vmatpush1.msra.mxu0 0.0
  %295 = vmatprep.subr.mxu0 0.0
  %296 = vmatpush1.msra.mxu0 0.0
  %297 = vmatprep.subr.mxu0 0.0
  %298 = vmatpush1.msra.mxu0 0.0
  %299 = vmatprep.subr.mxu0 0.0
  %300 = vmatpush1.msra.mxu0 0.0
  %301 = vmatprep.subr.mxu0 0.0
  %302 = vmatpush1.msra.mxu0 0.0
  %303 = vmatprep.subr.mxu0 0.0
  %304 = vmatpush1.msra.mxu0 0.0
  %305 = vmatprep.subr.mxu0 0.0
  %306 = vmatpush1.msra.mxu0 0.0
  %307 = vmatprep.subr.mxu0 0.0
  %308 = vmatpush1.msra.mxu0 0.0
  %309 = vmatprep.subr.mxu0 0.0
  %310 = vmatpush1.msra.mxu0 0.0
  %311 = vmatprep.subr.mxu0 0.0
  %312 = vmatpush1.msra.mxu0 0.0
  %313 = vmatprep.mubr.f32.mxu0 0.0
  %314 = vmatmul.mubr.f32.gmra.mrb[0].mxu0 %v226
  %v315 = vpop.f32.mrb[0].mxu0
  %v316 = vadd.f32 %v223, %v315
  %v317 = vpop.f32.mrb[0].mxu0
  %318 = vmatprep.mubr.f32.mxu0 0.0
  %319 = vmatmul.mubr.f32.gmra.mrb[0].mxu0 %v229
  %v320 = vpop.f32.mrb[0].mxu0
  %v321 = vadd.f32 %v223, %v320
  %v322 = vpop.f32.mrb[0].mxu0
  %323 = vmatprep.mubr.f32.mxu0 0.0
  %324 = vmatmul.mubr.f32.gmra.mrb[0].mxu0 %v232
  %v325 = vpop.f32.mrb[0].mxu0
  %v326 = vadd.f32 %v223, %v325
  %v327 = vpop.f32.mrb[0].mxu0
  %328 = vmatprep.mubr.f32.mxu0 0.0
  %329 = vmatmul.mubr.f32.gmra.mrb[0].mxu0 %v235
  %v330 = vpop.f32.mrb[0].mxu0
  %v331 = vadd.f32 %v223, %v330
  %v332 = vpop.f32.mrb[0].mxu0
  %333 = vmatprep.mubr.f32.mxu0 0.0
  %334 = vmatmul.mubr.f32.gmra.mrb[0].mxu0 %v238
  %v335 = vpop.f32.mrb[0].mxu0
  %v336 = vadd.f32 %v223, %v335
  %v337 = vpop.f32.mrb[0].mxu0
  %338 = vmatprep.mubr.f32.mxu0 0.0
  %339 = vmatmul.mubr.f32.gmra.mrb[0].mxu0 %v241
  %v340 = vpop.f32.mrb[0].mxu0
  %v341 = vadd.f32 %v223, %v340
  %v342 = vpop.f32.mrb[0].mxu0
  %343 = vmatprep.mubr.f32.mxu0 0.0
  %344 = vmatmul.mubr.f32.gmra.mrb[0].mxu0 %v244
  %v345 = vpop.f32.mrb[0].mxu0
  %v346 = vadd.f32 %v223, %v345
  %v347 = vpop.f32.mrb[0].mxu0
  %348 = vmatprep.mubr.f32.mxu0 0.0
  %349 = vmatmul.mubr.f32.gmra.mrb[0].mxu0 %v247
  %v350 = vpop.f32.mrb[0].mxu0
  %v351 = vadd.f32 %v223, %v350
  %v352 = vpop.f32.mrb[0].mxu0
  %353 = vdwg.mxu0
  %vm354 = vcmp.ge.f32.partialorder %v316, 0.0
  %vm355 = vcmp.ge.f32.partialorder %v321, 0.0
  %vm356 = vcmp.ge.f32.partialorder %v326, 0.0
  %vm357 = vcmp.ge.f32.partialorder %v331, 0.0
  %vm358 = vcmp.ge.f32.partialorder %v336, 0.0
  %vm359 = vcmp.ge.f32.partialorder %v341, 0.0
  %vm360 = vcmp.ge.f32.partialorder %v346, 0.0
  %vm361 = vcmp.ge.f32.partialorder %v351, 0.0
  %v362 = vmul.f32 %v316, 0.2
  %v363 = vmul.f32 %v321, 0.2
  %v364 = vmul.f32 %v326, 0.2
  %v365 = vmul.f32 %v331, 0.2
  %v366 = vmul.f32 %v336, 0.2
  %v367 = vmul.f32 %v341, 0.2
  %v368 = vmul.f32 %v346, 0.2
  %v369 = vmul.f32 %v351, 0.2
  %v370 = vsel %vm354, %v316, %v362
  %v371 = vsel %vm355, %v321, %v363
  %v372 = vsel %vm356, %v326, %v364
  %v373 = vsel %vm357, %v331, %v365
  %v374 = vsel %vm358, %v336, %v366
  %v375 = vsel %vm359, %v341, %v367
  %v376 = vsel %vm360, %v346, %v368
  %v377 = vsel %vm361, %v351, %v369
  %v378 = vld [vmem:[%s6] sm:$0xff]
  %v379 = vld [vmem:[%s6 + $0x8] sm:$0xff]
  %v380 = vld [vmem:[%s6 + $0x10] sm:$0xff]
  %v381 = vld [vmem:[%s6 + $0x18] sm:$0xff]
  %v382 = vlaneseq
  %v383 = vshrl.u32 %v382, 7
  %v384 = vsub.s32 0, %v383
  %v385 = vrot.slane %v43, %v384
  %vm386 = vcmask 261120
  %v388 = vsel %vm386, %v370, 0
  %v391 = vsel %vm386, %v371, 0
  %v394 = vsel %vm386, %v372, 0
  %v397 = vsel %vm386, %v373, 0
  %v400 = vsel %vm386, %v374, 0
  %v403 = vsel %vm386, %v375, 0
  %v406 = vsel %vm386, %v376, 0
  %v409 = vsel %vm386, %v377, 0
  %411 = vmatprep.subr.mxu0 0.0
  %412 = vmatpush1.msra.mxu0 %v378
  %413 = vmatprep.subr.mxu0 0.0
  %414 = vmatpush1.msra.mxu0 %v379
  %415 = vmatprep.subr.mxu0 0.0
  %416 = vmatpush1.msra.mxu0 %v380
  %417 = vmatprep.subr.mxu0 0.0
  %418 = vmatpush1.msra.mxu0 %v381
  %419 = vmatprep.subr.mxu0 0.0
  %420 = vmatpush1.msra.mxu0 0.0
  %421 = vmatprep.subr.mxu0 0.0
  %422 = vmatpush1.msra.mxu0 0.0
  %423 = vmatprep.subr.mxu0 0.0
  %424 = vmatpush1.msra.mxu0 0.0
  %425 = vmatprep.subr.mxu0 0.0
  %426 = vmatpush1.msra.mxu0 0.0
  %427 = vmatprep.subr.mxu0 0.0
  %428 = vmatpush1.msra.mxu0 0.0
  %429 = vmatprep.subr.mxu0 0.0
  %430 = vmatpush1.msra.mxu0 0.0
  %431 = vmatprep.subr.mxu0 0.0
  %432 = vmatpush1.msra.mxu0 0.0
  %433 = vmatprep.subr.mxu0 0.0
  %434 = vmatpush1.msra.mxu0 0.0
  %435 = vmatprep.subr.mxu0 0.0
  %436 = vmatpush1.msra.mxu0 0.0
  %437 = vmatprep.subr.mxu0 0.0
  %438 = vmatpush1.msra.mxu0 0.0
  %439 = vmatprep.subr.mxu0 0.0
  %440 = vmatpush1.msra.mxu0 0.0
  %441 = vmatprep.subr.mxu0 0.0
  %442 = vmatpush1.msra.mxu0 0.0
  %443 = vmatprep.subr.mxu0 0.0
  %444 = vmatpush1.msra.mxu0 0.0
  %445 = vmatprep.subr.mxu0 0.0
  %446 = vmatpush1.msra.mxu0 0.0
  %447 = vmatprep.subr.mxu0 0.0
  %448 = vmatpush1.msra.mxu0 0.0
  %449 = vmatprep.subr.mxu0 0.0
  %450 = vmatpush1.msra.mxu0 0.0
  %451 = vmatprep.subr.mxu0 0.0
  %452 = vmatpush1.msra.mxu0 0.0
  %453 = vmatprep.subr.mxu0 0.0
  %454 = vmatpush1.msra.mxu0 0.0
  %455 = vmatprep.subr.mxu0 0.0
  %456 = vmatpush1.msra.mxu0 0.0
  %457 = vmatprep.subr.mxu0 0.0
  %458 = vmatpush1.msra.mxu0 0.0
  %459 = vmatprep.subr.mxu0 0.0
  %460 = vmatpush1.msra.mxu0 0.0
  %461 = vmatprep.subr.mxu0 0.0
  %462 = vmatpush1.msra.mxu0 0.0
  %463 = vmatprep.subr.mxu0 0.0
  %464 = vmatpush1.msra.mxu0 0.0
  %465 = vmatprep.subr.mxu0 0.0
  %466 = vmatpush1.msra.mxu0 0.0
  %467 = vmatprep.subr.mxu0 0.0
  %468 = vmatpush1.msra.mxu0 0.0
  %469 = vmatprep.subr.mxu0 0.0
  %470 = vmatpush1.msra.mxu0 0.0
  %471 = vmatprep.subr.mxu0 0.0
  %472 = vmatpush1.msra.mxu0 0.0
  %473 = vmatprep.subr.mxu0 0.0
  %474 = vmatpush1.msra.mxu0 0.0
  %475 = vmatprep.mubr.f32.mxu0 0.0
  %476 = vmatmul.mubr.f32.gmra.mrb[0].mxu0 %v388
  %v477 = vpop.f32.mrb[0].mxu0
  %v478 = vadd.f32 %v385, %v477
  %v479 = vpop.f32.mrb[0].mxu0
  %480 = vmatprep.mubr.f32.mxu0 0.0
  %481 = vmatmul.mubr.f32.gmra.mrb[0].mxu0 %v391
  %v482 = vpop.f32.mrb[0].mxu0
  %v483 = vadd.f32 %v385, %v482
  %v484 = vpop.f32.mrb[0].mxu0
  %485 = vmatprep.mubr.f32.mxu0 0.0
  %486 = vmatmul.mubr.f32.gmra.mrb[0].mxu0 %v394
  %v487 = vpop.f32.mrb[0].mxu0
  %v488 = vadd.f32 %v385, %v487
  %v489 = vpop.f32.mrb[0].mxu0
  %490 = vmatprep.mubr.f32.mxu0 0.0
  %491 = vmatmul.mubr.f32.gmra.mrb[0].mxu0 %v397
  %v492 = vpop.f32.mrb[0].mxu0
  %v493 = vadd.f32 %v385, %v492
  %v494 = vpop.f32.mrb[0].mxu0
  %495 = vmatprep.mubr.f32.mxu0 0.0
  %496 = vmatmul.mubr.f32.gmra.mrb[0].mxu0 %v400
  %v497 = vpop.f32.mrb[0].mxu0
  %v498 = vadd.f32 %v385, %v497
  %v499 = vpop.f32.mrb[0].mxu0
  %500 = vmatprep.mubr.f32.mxu0 0.0
  %501 = vmatmul.mubr.f32.gmra.mrb[0].mxu0 %v403
  %v502 = vpop.f32.mrb[0].mxu0
  %v503 = vadd.f32 %v385, %v502
  %v504 = vpop.f32.mrb[0].mxu0
  %505 = vmatprep.mubr.f32.mxu0 0.0
  %506 = vmatmul.mubr.f32.gmra.mrb[0].mxu0 %v406
  %v507 = vpop.f32.mrb[0].mxu0
  %v508 = vadd.f32 %v385, %v507
  %v509 = vpop.f32.mrb[0].mxu0
  %510 = vmatprep.mubr.f32.mxu0 0.0
  %511 = vmatmul.mubr.f32.gmra.mrb[0].mxu0 %v409
  %v512 = vpop.f32.mrb[0].mxu0
  %v513 = vadd.f32 %v385, %v512
  %v514 = vpop.f32.mrb[0].mxu0
  %515 = vdwg.mxu0
  %516 = vst [vmem:[#allocation2] sm:$0xff] %v478
  %517 = vst [vmem:[#allocation2 + $0x8] sm:$0xff] %v483
  %518 = vst [vmem:[#allocation2 + $0x10] sm:$0xff] %v488
  %519 = vst [vmem:[#allocation2 + $0x18] sm:$0xff] %v493
  %520 = vst [vmem:[#allocation2 + $0x20] sm:$0xff] %v498
  %521 = vst [vmem:[#allocation2 + $0x28] sm:$0xff] %v503
  %522 = vst [vmem:[#allocation2 + $0x30] sm:$0xff] %v508
  %523 = vst [vmem:[#allocation2 + $0x38] sm:$0xff] %v513
  %v524 = vld [vmem:[%s8] sm:$0xff]
  %v525 = vld [vmem:[%s8 + $0x8] sm:$0xff]
  %v526 = vld [vmem:[%s8 + $0x10] sm:$0xff]
  %v527 = vld [vmem:[%s8 + $0x18] sm:$0xff]
  %v528 = vld [vmem:[%s8 + $0x20] sm:$0xff]
  %v529 = vld [vmem:[%s1] sm:$0xff]
  %v530 = vlaneseq
  %v531 = vshrl.u32 %v530, 7
  %v532 = vsub.s32 0, %v531
  %v533 = vrot.slane %v44, %v532
  %vm534 = vcmask 64512
  %v536 = vsel %vm534, %v529, 0
  %538 = vmatprep.subr.mxu0 0.0
  %539 = vmatpush1.msra.mxu0 %v528
  %540 = vmatprep.subr.mxu0 0.0
  %541 = vmatpush1.msra.mxu0 0.0
  %542 = vmatprep.subr.mxu0 0.0
  %543 = vmatpush1.msra.mxu0 0.0
  %544 = vmatprep.subr.mxu0 0.0
  %545 = vmatpush1.msra.mxu0 0.0
  %546 = vmatprep.subr.mxu0 0.0
  %547 = vmatpush1.msra.mxu0 0.0
  %548 = vmatprep.subr.mxu0 0.0
  %549 = vmatpush1.msra.mxu0 0.0
  %550 = vmatprep.subr.mxu0 0.0
  %551 = vmatpush1.msra.mxu0 0.0
  %552 = vmatprep.subr.mxu0 0.0
  %553 = vmatpush1.msra.mxu0 0.0
  %554 = vmatprep.subr.mxu0 0.0
  %555 = vmatpush1.msra.mxu0 0.0
  %556 = vmatprep.subr.mxu0 0.0
  %557 = vmatpush1.msra.mxu0 0.0
  %558 = vmatprep.subr.mxu0 0.0
  %559 = vmatpush1.msra.mxu0 0.0
  %560 = vmatprep.subr.mxu0 0.0
  %561 = vmatpush1.msra.mxu0 0.0
  %562 = vmatprep.subr.mxu0 0.0
  %563 = vmatpush1.msra.mxu0 0.0
  %564 = vmatprep.subr.mxu0 0.0
  %565 = vmatpush1.msra.mxu0 0.0
  %566 = vmatprep.subr.mxu0 0.0
  %567 = vmatpush1.msra.mxu0 0.0
  %568 = vmatprep.subr.mxu0 0.0
  %569 = vmatpush1.msra.mxu0 0.0
  %570 = vmatprep.subr.mxu0 0.0
  %571 = vmatpush1.msra.mxu0 0.0
  %572 = vmatprep.subr.mxu0 0.0
  %573 = vmatpush1.msra.mxu0 0.0
  %574 = vmatprep.subr.mxu0 0.0
  %575 = vmatpush1.msra.mxu0 0.0
  %576 = vmatprep.subr.mxu0 0.0
  %577 = vmatpush1.msra.mxu0 0.0
  %578 = vmatprep.subr.mxu0 0.0
  %579 = vmatpush1.msra.mxu0 0.0
  %580 = vmatprep.subr.mxu0 0.0
  %581 = vmatpush1.msra.mxu0 0.0
  %582 = vmatprep.subr.mxu0 0.0
  %583 = vmatpush1.msra.mxu0 0.0
  %584 = vmatprep.subr.mxu0 0.0
  %585 = vmatpush1.msra.mxu0 0.0
  %586 = vmatprep.subr.mxu0 0.0
  %587 = vmatpush1.msra.mxu0 0.0
  %588 = vmatprep.subr.mxu0 0.0
  %589 = vmatpush1.msra.mxu0 0.0
  %590 = vmatprep.subr.mxu0 0.0
  %591 = vmatpush1.msra.mxu0 0.0
  %592 = vmatprep.subr.mxu0 0.0
  %593 = vmatpush1.msra.mxu0 0.0
  %594 = vmatprep.subr.mxu0 0.0
  %595 = vmatpush1.msra.mxu0 0.0
  %596 = vmatprep.subr.mxu0 0.0
  %597 = vmatpush1.msra.mxu0 0.0
  %598 = vmatprep.subr.mxu0 0.0
  %599 = vmatpush1.msra.mxu0 0.0
  %600 = vmatprep.subr.mxu0 0.0
  %601 = vmatpush1.msra.mxu0 0.0
  %602 = vmatprep.mubr.f32.mxu0 0.0
  %603 = vmatmul.mubr.f32.gmra.mrb[0].mxu0 %v536
  %v604 = vpop.f32.mrb[0].mxu0
  %v605 = vadd.f32 %v533, %v604
  %v606 = vpop.f32.mrb[0].mxu0
  %607 = vdwg.mxu0
  %v608 = vld [vmem:[%s7] sm:$0xff]
  %v609 = vld [vmem:[%s7 + $0x8] sm:$0xff]
  %v610 = vld [vmem:[%s7 + $0x10] sm:$0xff]
  %v611 = vld [vmem:[%s7 + $0x18] sm:$0xff]
  %v612 = vld [vmem:[%s2] sm:$0xff]
  %v613 = vld [vmem:[#allocation2] sm:$0xff]
  %v615 = vsel %vm386, 0.0, 0
  %617 = vmatprep.subr.mxu0 0.0
  %618 = vmatpush1.msra.mxu0 %v608
  %619 = vmatprep.subr.mxu0 0.0
  %620 = vmatpush1.msra.mxu0 %v609
  %621 = vmatprep.subr.mxu0 0.0
  %622 = vmatpush1.msra.mxu0 %v610
  %623 = vmatprep.subr.mxu0 0.0
  %624 = vmatpush1.msra.mxu0 %v611
  %625 = vmatprep.subr.mxu0 0.0
  %626 = vmatpush1.msra.mxu0 0.0
  %627 = vmatprep.subr.mxu0 0.0
  %628 = vmatpush1.msra.mxu0 0.0
  %629 = vmatprep.subr.mxu0 0.0
  %630 = vmatpush1.msra.mxu0 0.0
  %631 = vmatprep.subr.mxu0 0.0
  %632 = vmatpush1.msra.mxu0 0.0
  %633 = vmatprep.subr.mxu0 0.0
  %634 = vmatpush1.msra.mxu0 0.0
  %635 = vmatprep.subr.mxu0 0.0
  %636 = vmatpush1.msra.mxu0 0.0
  %637 = vmatprep.subr.mxu0 0.0
  %638 = vmatpush1.msra.mxu0 0.0
  %639 = vmatprep.subr.mxu0 0.0
  %640 = vmatpush1.msra.mxu0 0.0
  %641 = vmatprep.subr.mxu0 0.0
  %642 = vmatpush1.msra.mxu0 0.0
  %643 = vmatprep.subr.mxu0 0.0
  %644 = vmatpush1.msra.mxu0 0.0
  %645 = vmatprep.subr.mxu0 0.0
  %646 = vmatpush1.msra.mxu0 0.0
  %647 = vmatprep.subr.mxu0 0.0
  %648 = vmatpush1.msra.mxu0 0.0
  %649 = vmatprep.subr.mxu0 0.0
  %650 = vmatpush1.msra.mxu0 0.0
  %651 = vmatprep.subr.mxu0 0.0
  %652 = vmatpush1.msra.mxu0 0.0
  %653 = vmatprep.subr.mxu0 0.0
  %654 = vmatpush1.msra.mxu0 0.0
  %655 = vmatprep.subr.mxu0 0.0
  %656 = vmatpush1.msra.mxu0 0.0
  %657 = vmatprep.subr.mxu0 0.0
  %658 = vmatpush1.msra.mxu0 0.0
  %659 = vmatprep.subr.mxu0 0.0
  %660 = vmatpush1.msra.mxu0 0.0
  %661 = vmatprep.subr.mxu0 0.0
  %662 = vmatpush1.msra.mxu0 0.0
  %663 = vmatprep.subr.mxu0 0.0
  %664 = vmatpush1.msra.mxu0 0.0
  %665 = vmatprep.subr.mxu0 0.0
  %666 = vmatpush1.msra.mxu0 0.0
  %667 = vmatprep.subr.mxu0 0.0
  %668 = vmatpush1.msra.mxu0 0.0
  %669 = vmatprep.subr.mxu0 0.0
  %670 = vmatpush1.msra.mxu0 0.0
  %671 = vmatprep.subr.mxu0 0.0
  %672 = vmatpush1.msra.mxu0 0.0
  %673 = vmatprep.subr.mxu0 0.0
  %674 = vmatpush1.msra.mxu0 0.0
  %675 = vmatprep.subr.mxu0 0.0
  %676 = vmatpush1.msra.mxu0 0.0
  %677 = vmatprep.subr.mxu0 0.0
  %678 = vmatpush1.msra.mxu0 0.0
  %679 = vmatprep.subr.mxu0 0.0
  %680 = vmatpush1.msra.mxu0 0.0
  %681 = vmatprep.mubr.f32.mxu0 0.0
  %682 = vmatmul.mubr.f32.gmra.mrb[0].mxu0 %v615
  %v683 = vpop.f32.mrb[0].mxu0
  %v684 = vadd.f32 0.0, %v683
  %v685 = vpop.f32.mrb[0].mxu0
  %686 = vdwg.mxu0
  %v687 = vadd.f32 %v613, %v684
  %v688 = vxor.u32 %v687, 2147483648
  %v689 = vmul.f32 %v688, 1.442695
  %v690 = vpow.pop %v689
  %v691 = vadd.f32 %v690, 1.0
  %v692 = vrcp.pop %v691
  %v693 = vmul.f32 1.0, %v692
  %v694 = vtanh.pop %v687
  %v695 = vmul.f32 %v693, 0.0
  %697 = vrot.lane.b32.xlu0 %v694, 64
  %v698 = vpop.permute.xlu0 %697
  %v700 = vmul.f32 %v693, %v698
  %702 = vrot.lane.b32.xlu0 %v700, 32
  %v703 = vpop.permute.xlu0 %702
  %v705 = vadd.f32 %v695, %v703
  %v706 = vtanh.pop %v705
  %708 = vrot.lane.b32.xlu0 %v706, 64
  %v709 = vpop.permute.xlu0 %708
  %v711 = vmul.f32 %v693, %v709
  %vm712 = vcmp.eq.s32.totalorder %v612, 0
  %v713 = vsel %vm712, 1, 0
  %714 = vset.pattern.permute.xlu0 0
  %715 = vperm.xlu0 %714, %v713
  %v716 = vpop.permute.xlu0 %715
  %vm717 = vcmp.eq.s32.totalorder %v716, 1
  %v718 = vsel %vm717, %v711, 0.0
  %v719 = vld [vmem:[#allocation2 + $0x8] sm:$0xff]
  %721 = vrot.lane.b32.xlu0 %v711, 32
  %v722 = vpop.permute.xlu0 %721
  %v723 = vsel %vm386, %v722, 0
  %725 = vmatprep.subr.mxu0 0.0
  %726 = vmatpush1.msra.mxu0 %v608
  %727 = vmatprep.subr.mxu0 0.0
  %728 = vmatpush1.msra.mxu0 %v609
  %729 = vmatprep.subr.mxu0 0.0
  %730 = vmatpush1.msra.mxu0 %v610
  %731 = vmatprep.subr.mxu0 0.0
  %732 = vmatpush1.msra.mxu0 %v611
  %733 = vmatprep.subr.mxu0 0.0
  %734 = vmatpush1.msra.mxu0 0.0
  %735 = vmatprep.subr.mxu0 0.0
  %736 = vmatpush1.msra.mxu0 0.0
  %737 = vmatprep.subr.mxu0 0.0
  %738 = vmatpush1.msra.mxu0 0.0
  %739 = vmatprep.subr.mxu0 0.0
  %740 = vmatpush1.msra.mxu0 0.0
  %741 = vmatprep.subr.mxu0 0.0
  %742 = vmatpush1.msra.mxu0 0.0
  %743 = vmatprep.subr.mxu0 0.0
  %744 = vmatpush1.msra.mxu0 0.0
  %745 = vmatprep.subr.mxu0 0.0
  %746 = vmatpush1.msra.mxu0 0.0
  %747 = vmatprep.subr.mxu0 0.0
  %748 = vmatpush1.msra.mxu0 0.0
  %749 = vmatprep.subr.mxu0 0.0
  %750 = vmatpush1.msra.mxu0 0.0
  %751 = vmatprep.subr.mxu0 0.0
  %752 = vmatpush1.msra.mxu0 0.0
  %753 = vmatprep.subr.mxu0 0.0
  %754 = vmatpush1.msra.mxu0 0.0
  %755 = vmatprep.subr.mxu0 0.0
  %756 = vmatpush1.msra.mxu0 0.0
  %757 = vmatprep.subr.mxu0 0.0
  %758 = vmatpush1.msra.mxu0 0.0
  %759 = vmatprep.subr.mxu0 0.0
  %760 = vmatpush1.msra.mxu0 0.0
  %761 = vmatprep.subr.mxu0 0.0
  %762 = vmatpush1.msra.mxu0 0.0
  %763 = vmatprep.subr.mxu0 0.0
  %764 = vmatpush1.msra.mxu0 0.0
  %765 = vmatprep.subr.mxu0 0.0
  %766 = vmatpush1.msra.mxu0 0.0
  %767 = vmatprep.subr.mxu0 0.0
  %768 = vmatpush1.msra.mxu0 0.0
  %769 = vmatprep.subr.mxu0 0.0
  %770 = vmatpush1.msra.mxu0 0.0
  %771 = vmatprep.subr.mxu0 0.0
  %772 = vmatpush1.msra.mxu0 0.0
  %773 = vmatprep.subr.mxu0 0.0
  %774 = vmatpush1.msra.mxu0 0.0
  %775 = vmatprep.subr.mxu0 0.0
  %776 = vmatpush1.msra.mxu0 0.0
  %777 = vmatprep.subr.mxu0 0.0
  %778 = vmatpush1.msra.mxu0 0.0
  %779 = vmatprep.subr.mxu0 0.0
  %780 = vmatpush1.msra.mxu0 0.0
  %781 = vmatprep.subr.mxu0 0.0
  %782 = vmatpush1.msra.mxu0 0.0
  %783 = vmatprep.subr.mxu0 0.0
  %784 = vmatpush1.msra.mxu0 0.0
  %785 = vmatprep.subr.mxu0 0.0
  %786 = vmatpush1.msra.mxu0 0.0
  %787 = vmatprep.subr.mxu0 0.0
  %788 = vmatpush1.msra.mxu0 0.0
  %789 = vmatprep.mubr.f32.mxu0 0.0
  %790 = vmatmul.mubr.f32.gmra.mrb[0].mxu0 %v723
  %v791 = vpop.f32.mrb[0].mxu0
  %v792 = vadd.f32 0.0, %v791
  %v793 = vpop.f32.mrb[0].mxu0
  %794 = vdwg.mxu0
  %v795 = vadd.f32 %v719, %v792
  %v796 = vxor.u32 %v795, 2147483648
  %v797 = vmul.f32 %v796, 1.442695
  %v798 = vpow.pop %v797
  %v799 = vadd.f32 %v798, 1.0
  %v800 = vrcp.pop %v799
  %v801 = vmul.f32 1.0, %v800
  %v802 = vtanh.pop %v795
  %v803 = vmul.f32 %v801, %v705
  %805 = vrot.lane.b32.xlu0 %v802, 64
  %v806 = vpop.permute.xlu0 %805
  %v808 = vmul.f32 %v801, %v806
  %810 = vrot.lane.b32.xlu0 %v808, 32
  %v811 = vpop.permute.xlu0 %810
  %v813 = vadd.f32 %v803, %v811
  %v814 = vtanh.pop %v813
  %816 = vrot.lane.b32.xlu0 %v814, 64
  %v817 = vpop.permute.xlu0 %816
  %v819 = vmul.f32 %v801, %v817
  %vm820 = vcmp.eq.s32.totalorder %v612, 1
  %v821 = vsel %vm820, 1, 0
  %822 = vset.pattern.permute.xlu0 0
  %823 = vperm.xlu0 %822, %v821
  %v824 = vpop.permute.xlu0 %823
  %vm825 = vcmp.eq.s32.totalorder %v824, 1
  %v826 = vsel %vm825, %v819, %v718
  %v827 = vld [vmem:[#allocation2 + $0x10] sm:$0xff]
  %829 = vrot.lane.b32.xlu0 %v819, 32
  %v830 = vpop.permute.xlu0 %829
  %v831 = vsel %vm386, %v830, 0
  %833 = vmatprep.subr.mxu0 0.0
  %834 = vmatpush1.msra.mxu0 %v608
  %835 = vmatprep.subr.mxu0 0.0
  %836 = vmatpush1.msra.mxu0 %v609
  %837 = vmatprep.subr.mxu0 0.0
  %838 = vmatpush1.msra.mxu0 %v610
  %839 = vmatprep.subr.mxu0 0.0
  %840 = vmatpush1.msra.mxu0 %v611
  %841 = vmatprep.subr.mxu0 0.0
  %842 = vmatpush1.msra.mxu0 0.0
  %843 = vmatprep.subr.mxu0 0.0
  %844 = vmatpush1.msra.mxu0 0.0
  %845 = vmatprep.subr.mxu0 0.0
  %846 = vmatpush1.msra.mxu0 0.0
  %847 = vmatprep.subr.mxu0 0.0
  %848 = vmatpush1.msra.mxu0 0.0
  %849 = vmatprep.subr.mxu0 0.0
  %850 = vmatpush1.msra.mxu0 0.0
  %851 = vmatprep.subr.mxu0 0.0
  %852 = vmatpush1.msra.mxu0 0.0
  %853 = vmatprep.subr.mxu0 0.0
  %854 = vmatpush1.msra.mxu0 0.0
  %855 = vmatprep.subr.mxu0 0.0
  %856 = vmatpush1.msra.mxu0 0.0
  %857 = vmatprep.subr.mxu0 0.0
  %858 = vmatpush1.msra.mxu0 0.0
  %859 = vmatprep.subr.mxu0 0.0
  %860 = vmatpush1.msra.mxu0 0.0
  %861 = vmatprep.subr.mxu0 0.0
  %862 = vmatpush1.msra.mxu0 0.0
  %863 = vmatprep.subr.mxu0 0.0
  %864 = vmatpush1.msra.mxu0 0.0
  %865 = vmatprep.subr.mxu0 0.0
  %866 = vmatpush1.msra.mxu0 0.0
  %867 = vmatprep.subr.mxu0 0.0
  %868 = vmatpush1.msra.mxu0 0.0
  %869 = vmatprep.subr.mxu0 0.0
  %870 = vmatpush1.msra.mxu0 0.0
  %871 = vmatprep.subr.mxu0 0.0
  %872 = vmatpush1.msra.mxu0 0.0
  %873 = vmatprep.subr.mxu0 0.0
  %874 = vmatpush1.msra.mxu0 0.0
  %875 = vmatprep.subr.mxu0 0.0
  %876 = vmatpush1.msra.mxu0 0.0
  %877 = vmatprep.subr.mxu0 0.0
  %878 = vmatpush1.msra.mxu0 0.0
  %879 = vmatprep.subr.mxu0 0.0
  %880 = vmatpush1.msra.mxu0 0.0
  %881 = vmatprep.subr.mxu0 0.0
  %882 = vmatpush1.msra.mxu0 0.0
  %883 = vmatprep.subr.mxu0 0.0
  %884 = vmatpush1.msra.mxu0 0.0
  %885 = vmatprep.subr.mxu0 0.0
  %886 = vmatpush1.msra.mxu0 0.0
  %887 = vmatprep.subr.mxu0 0.0
  %888 = vmatpush1.msra.mxu0 0.0
  %889 = vmatprep.subr.mxu0 0.0
  %890 = vmatpush1.msra.mxu0 0.0
  %891 = vmatprep.subr.mxu0 0.0
  %892 = vmatpush1.msra.mxu0 0.0
  %893 = vmatprep.subr.mxu0 0.0
  %894 = vmatpush1.msra.mxu0 0.0
  %895 = vmatprep.subr.mxu0 0.0
  %896 = vmatpush1.msra.mxu0 0.0
  %897 = vmatprep.mubr.f32.mxu0 0.0
  %898 = vmatmul.mubr.f32.gmra.mrb[0].mxu0 %v831
  %v899 = vpop.f32.mrb[0].mxu0
  %v900 = vadd.f32 0.0, %v899
  %v901 = vpop.f32.mrb[0].mxu0
  %902 = vdwg.mxu0
  %v903 = vadd.f32 %v827, %v900
  %v904 = vxor.u32 %v903, 2147483648
  %v905 = vmul.f32 %v904, 1.442695
  %v906 = vpow.pop %v905
  %v907 = vadd.f32 %v906, 1.0
  %v908 = vrcp.pop %v907
  %v909 = vmul.f32 1.0, %v908
  %v910 = vtanh.pop %v903
  %v911 = vmul.f32 %v909, %v813
  %913 = vrot.lane.b32.xlu0 %v910, 64
  %v914 = vpop.permute.xlu0 %913
  %v916 = vmul.f32 %v909, %v914
  %918 = vrot.lane.b32.xlu0 %v916, 32
  %v919 = vpop.permute.xlu0 %918
  %v921 = vadd.f32 %v911, %v919
  %v922 = vtanh.pop %v921
  %924 = vrot.lane.b32.xlu0 %v922, 64
  %v925 = vpop.permute.xlu0 %924
  %v927 = vmul.f32 %v909, %v925
  %vm928 = vcmp.eq.s32.totalorder %v612, 2
  %v929 = vsel %vm928, 1, 0
  %930 = vset.pattern.permute.xlu0 0
  %931 = vperm.xlu0 %930, %v929
  %v932 = vpop.permute.xlu0 %931
  %vm933 = vcmp.eq.s32.totalorder %v932, 1
  %v934 = vsel %vm933, %v927, %v826
  %v935 = vld [vmem:[#allocation2 + $0x18] sm:$0xff]
  %937 = vrot.lane.b32.xlu0 %v927, 32
  %v938 = vpop.permute.xlu0 %937
  %v939 = vsel %vm386, %v938, 0
  %941 = vmatprep.subr.mxu0 0.0
  %942 = vmatpush1.msra.mxu0 %v608
  %943 = vmatprep.subr.mxu0 0.0
  %944 = vmatpush1.msra.mxu0 %v609
  %945 = vmatprep.subr.mxu0 0.0
  %946 = vmatpush1.msra.mxu0 %v610
  %947 = vmatprep.subr.mxu0 0.0
  %948 = vmatpush1.msra.mxu0 %v611
  %949 = vmatprep.subr.mxu0 0.0
  %950 = vmatpush1.msra.mxu0 0.0
  %951 = vmatprep.subr.mxu0 0.0
  %952 = vmatpush1.msra.mxu0 0.0
  %953 = vmatprep.subr.mxu0 0.0
  %954 = vmatpush1.msra.mxu0 0.0
  %955 = vmatprep.subr.mxu0 0.0
  %956 = vmatpush1.msra.mxu0 0.0
  %957 = vmatprep.subr.mxu0 0.0
  %958 = vmatpush1.msra.mxu0 0.0
  %959 = vmatprep.subr.mxu0 0.0
  %960 = vmatpush1.msra.mxu0 0.0
  %961 = vmatprep.subr.mxu0 0.0
  %962 = vmatpush1.msra.mxu0 0.0
  %963 = vmatprep.subr.mxu0 0.0
  %964 = vmatpush1.msra.mxu0 0.0
  %965 = vmatprep.subr.mxu0 0.0
  %966 = vmatpush1.msra.mxu0 0.0
  %967 = vmatprep.subr.mxu0 0.0
  %968 = vmatpush1.msra.mxu0 0.0
  %969 = vmatprep.subr.mxu0 0.0
  %970 = vmatpush1.msra.mxu0 0.0
  %971 = vmatprep.subr.mxu0 0.0
  %972 = vmatpush1.msra.mxu0 0.0
  %973 = vmatprep.subr.mxu0 0.0
  %974 = vmatpush1.msra.mxu0 0.0
  %975 = vmatprep.subr.mxu0 0.0
  %976 = vmatpush1.msra.mxu0 0.0
  %977 = vmatprep.subr.mxu0 0.0
  %978 = vmatpush1.msra.mxu0 0.0
  %979 = vmatprep.subr.mxu0 0.0
  %980 = vmatpush1.msra.mxu0 0.0
  %981 = vmatprep.subr.mxu0 0.0
  %982 = vmatpush1.msra.mxu0 0.0
  %983 = vmatprep.subr.mxu0 0.0
  %984 = vmatpush1.msra.mxu0 0.0
  %985 = vmatprep.subr.mxu0 0.0
  %986 = vmatpush1.msra.mxu0 0.0
  %987 = vmatprep.subr.mxu0 0.0
  %988 = vmatpush1.msra.mxu0 0.0
  %989 = vmatprep.subr.mxu0 0.0
  %990 = vmatpush1.msra.mxu0 0.0
  %991 = vmatprep.subr.mxu0 0.0
  %992 = vmatpush1.msra.mxu0 0.0
  %993 = vmatprep.subr.mxu0 0.0
  %994 = vmatpush1.msra.mxu0 0.0
  %995 = vmatprep.subr.mxu0 0.0
  %996 = vmatpush1.msra.mxu0 0.0
  %997 = vmatprep.subr.mxu0 0.0
  %998 = vmatpush1.msra.mxu0 0.0
  %999 = vmatprep.subr.mxu0 0.0
  %1000 = vmatpush1.msra.mxu0 0.0
  %1001 = vmatprep.subr.mxu0 0.0
  %1002 = vmatpush1.msra.mxu0 0.0
  %1003 = vmatprep.subr.mxu0 0.0
  %1004 = vmatpush1.msra.mxu0 0.0
  %1005 = vmatprep.mubr.f32.mxu0 0.0
  %1006 = vmatmul.mubr.f32.gmra.mrb[0].mxu0 %v939
  %v1007 = vpop.f32.mrb[0].mxu0
  %v1008 = vadd.f32 0.0, %v1007
  %v1009 = vpop.f32.mrb[0].mxu0
  %1010 = vdwg.mxu0
  %v1011 = vadd.f32 %v935, %v1008
  %v1012 = vxor.u32 %v1011, 2147483648
  %v1013 = vmul.f32 %v1012, 1.442695
  %v1014 = vpow.pop %v1013
  %v1015 = vadd.f32 %v1014, 1.0
  %v1016 = vrcp.pop %v1015
  %v1017 = vmul.f32 1.0, %v1016
  %v1018 = vtanh.pop %v1011
  %v1019 = vmul.f32 %v1017, %v921
  %1021 = vrot.lane.b32.xlu0 %v1018, 64
  %v1022 = vpop.permute.xlu0 %1021
  %v1024 = vmul.f32 %v1017, %v1022
  %1026 = vrot.lane.b32.xlu0 %v1024, 32
  %v1027 = vpop.permute.xlu0 %1026
  %v1029 = vadd.f32 %v1019, %v1027
  %v1030 = vtanh.pop %v1029
  %1032 = vrot.lane.b32.xlu0 %v1030, 64
  %v1033 = vpop.permute.xlu0 %1032
  %v1035 = vmul.f32 %v1017, %v1033
  %vm1036 = vcmp.eq.s32.totalorder %v612, 3
  %v1037 = vsel %vm1036, 1, 0
  %1038 = vset.pattern.permute.xlu0 0
  %1039 = vperm.xlu0 %1038, %v1037
  %v1040 = vpop.permute.xlu0 %1039
  %vm1041 = vcmp.eq.s32.totalorder %v1040, 1
  %v1042 = vsel %vm1041, %v1035, %v934
  %v1043 = vld [vmem:[#allocation2 + $0x20] sm:$0xff]
  %1045 = vrot.lane.b32.xlu0 %v1035, 32
  %v1046 = vpop.permute.xlu0 %1045
  %v1047 = vsel %vm386, %v1046, 0
  %1049 = vmatprep.subr.mxu0 0.0
  %1050 = vmatpush1.msra.mxu0 %v608
  %1051 = vmatprep.subr.mxu0 0.0
  %1052 = vmatpush1.msra.mxu0 %v609
  %1053 = vmatprep.subr.mxu0 0.0
  %1054 = vmatpush1.msra.mxu0 %v610
  %1055 = vmatprep.subr.mxu0 0.0
  %1056 = vmatpush1.msra.mxu0 %v611
  %1057 = vmatprep.subr.mxu0 0.0
  %1058 = vmatpush1.msra.mxu0 0.0
  %1059 = vmatprep.subr.mxu0 0.0
  %1060 = vmatpush1.msra.mxu0 0.0
  %1061 = vmatprep.subr.mxu0 0.0
  %1062 = vmatpush1.msra.mxu0 0.0
  %1063 = vmatprep.subr.mxu0 0.0
  %1064 = vmatpush1.msra.mxu0 0.0
  %1065 = vmatprep.subr.mxu0 0.0
  %1066 = vmatpush1.msra.mxu0 0.0
  %1067 = vmatprep.subr.mxu0 0.0
  %1068 = vmatpush1.msra.mxu0 0.0
  %1069 = vmatprep.subr.mxu0 0.0
  %1070 = vmatpush1.msra.mxu0 0.0
  %1071 = vmatprep.subr.mxu0 0.0
  %1072 = vmatpush1.msra.mxu0 0.0
  %1073 = vmatprep.subr.mxu0 0.0
  %1074 = vmatpush1.msra.mxu0 0.0
  %1075 = vmatprep.subr.mxu0 0.0
  %1076 = vmatpush1.msra.mxu0 0.0
  %1077 = vmatprep.subr.mxu0 0.0
  %1078 = vmatpush1.msra.mxu0 0.0
  %1079 = vmatprep.subr.mxu0 0.0
  %1080 = vmatpush1.msra.mxu0 0.0
  %1081 = vmatprep.subr.mxu0 0.0
  %1082 = vmatpush1.msra.mxu0 0.0
  %1083 = vmatprep.subr.mxu0 0.0
  %1084 = vmatpush1.msra.mxu0 0.0
  %1085 = vmatprep.subr.mxu0 0.0
  %1086 = vmatpush1.msra.mxu0 0.0
  %1087 = vmatprep.subr.mxu0 0.0
  %1088 = vmatpush1.msra.mxu0 0.0
  %1089 = vmatprep.subr.mxu0 0.0
  %1090 = vmatpush1.msra.mxu0 0.0
  %1091 = vmatprep.subr.mxu0 0.0
  %1092 = vmatpush1.msra.mxu0 0.0
  %1093 = vmatprep.subr.mxu0 0.0
  %1094 = vmatpush1.msra.mxu0 0.0
  %1095 = vmatprep.subr.mxu0 0.0
  %1096 = vmatpush1.msra.mxu0 0.0
  %1097 = vmatprep.subr.mxu0 0.0
  %1098 = vmatpush1.msra.mxu0 0.0
  %1099 = vmatprep.subr.mxu0 0.0
  %1100 = vmatpush1.msra.mxu0 0.0
  %1101 = vmatprep.subr.mxu0 0.0
  %1102 = vmatpush1.msra.mxu0 0.0
  %1103 = vmatprep.subr.mxu0 0.0
  %1104 = vmatpush1.msra.mxu0 0.0
  %1105 = vmatprep.subr.mxu0 0.0
  %1106 = vmatpush1.msra.mxu0 0.0
  %1107 = vmatprep.subr.mxu0 0.0
  %1108 = vmatpush1.msra.mxu0 0.0
  %1109 = vmatprep.subr.mxu0 0.0
  %1110 = vmatpush1.msra.mxu0 0.0
  %1111 = vmatprep.subr.mxu0 0.0
  %1112 = vmatpush1.msra.mxu0 0.0
  %1113 = vmatprep.mubr.f32.mxu0 0.0
  %1114 = vmatmul.mubr.f32.gmra.mrb[0].mxu0 %v1047
  %v1115 = vpop.f32.mrb[0].mxu0
  %v1116 = vadd.f32 0.0, %v1115
  %v1117 = vpop.f32.mrb[0].mxu0
  %1118 = vdwg.mxu0
  %v1119 = vadd.f32 %v1043, %v1116
  %v1120 = vxor.u32 %v1119, 2147483648
  %v1121 = vmul.f32 %v1120, 1.442695
  %v1122 = vpow.pop %v1121
  %v1123 = vadd.f32 %v1122, 1.0
  %v1124 = vrcp.pop %v1123
  %v1125 = vmul.f32 1.0, %v1124
  %v1126 = vtanh.pop %v1119
  %v1127 = vmul.f32 %v1125, %v1029
  %1129 = vrot.lane.b32.xlu0 %v1126, 64
  %v1130 = vpop.permute.xlu0 %1129
  %v1132 = vmul.f32 %v1125, %v1130
  %1134 = vrot.lane.b32.xlu0 %v1132, 32
  %v1135 = vpop.permute.xlu0 %1134
  %v1137 = vadd.f32 %v1127, %v1135
  %v1138 = vtanh.pop %v1137
  %1140 = vrot.lane.b32.xlu0 %v1138, 64
  %v1141 = vpop.permute.xlu0 %1140
  %v1143 = vmul.f32 %v1125, %v1141
  %vm1144 = vcmp.eq.s32.totalorder %v612, 4
  %v1145 = vsel %vm1144, 1, 0
  %1146 = vset.pattern.permute.xlu0 0
  %1147 = vperm.xlu0 %1146, %v1145
  %v1148 = vpop.permute.xlu0 %1147
  %vm1149 = vcmp.eq.s32.totalorder %v1148, 1
  %v1150 = vsel %vm1149, %v1143, %v1042
  %v1151 = vld [vmem:[#allocation2 + $0x28] sm:$0xff]
  %1153 = vrot.lane.b32.xlu0 %v1143, 32
  %v1154 = vpop.permute.xlu0 %1153
  %v1155 = vsel %vm386, %v1154, 0
  %1157 = vmatprep.subr.mxu0 0.0
  %1158 = vmatpush1.msra.mxu0 %v608
  %1159 = vmatprep.subr.mxu0 0.0
  %1160 = vmatpush1.msra.mxu0 %v609
  %1161 = vmatprep.subr.mxu0 0.0
  %1162 = vmatpush1.msra.mxu0 %v610
  %1163 = vmatprep.subr.mxu0 0.0
  %1164 = vmatpush1.msra.mxu0 %v611
  %1165 = vmatprep.subr.mxu0 0.0
  %1166 = vmatpush1.msra.mxu0 0.0
  %1167 = vmatprep.subr.mxu0 0.0
  %1168 = vmatpush1.msra.mxu0 0.0
  %1169 = vmatprep.subr.mxu0 0.0
  %1170 = vmatpush1.msra.mxu0 0.0
  %1171 = vmatprep.subr.mxu0 0.0
  %1172 = vmatpush1.msra.mxu0 0.0
  %1173 = vmatprep.subr.mxu0 0.0
  %1174 = vmatpush1.msra.mxu0 0.0
  %1175 = vmatprep.subr.mxu0 0.0
  %1176 = vmatpush1.msra.mxu0 0.0
  %1177 = vmatprep.subr.mxu0 0.0
  %1178 = vmatpush1.msra.mxu0 0.0
  %1179 = vmatprep.subr.mxu0 0.0
  %1180 = vmatpush1.msra.mxu0 0.0
  %1181 = vmatprep.subr.mxu0 0.0
  %1182 = vmatpush1.msra.mxu0 0.0
  %1183 = vmatprep.subr.mxu0 0.0
  %1184 = vmatpush1.msra.mxu0 0.0
  %1185 = vmatprep.subr.mxu0 0.0
  %1186 = vmatpush1.msra.mxu0 0.0
  %1187 = vmatprep.subr.mxu0 0.0
  %1188 = vmatpush1.msra.mxu0 0.0
  %1189 = vmatprep.subr.mxu0 0.0
  %1190 = vmatpush1.msra.mxu0 0.0
  %1191 = vmatprep.subr.mxu0 0.0
  %1192 = vmatpush1.msra.mxu0 0.0
  %1193 = vmatprep.subr.mxu0 0.0
  %1194 = vmatpush1.msra.mxu0 0.0
  %1195 = vmatprep.subr.mxu0 0.0
  %1196 = vmatpush1.msra.mxu0 0.0
  %1197 = vmatprep.subr.mxu0 0.0
  %1198 = vmatpush1.msra.mxu0 0.0
  %1199 = vmatprep.subr.mxu0 0.0
  %1200 = vmatpush1.msra.mxu0 0.0
  %1201 = vmatprep.subr.mxu0 0.0
  %1202 = vmatpush1.msra.mxu0 0.0
  %1203 = vmatprep.subr.mxu0 0.0
  %1204 = vmatpush1.msra.mxu0 0.0
  %1205 = vmatprep.subr.mxu0 0.0
  %1206 = vmatpush1.msra.mxu0 0.0
  %1207 = vmatprep.subr.mxu0 0.0
  %1208 = vmatpush1.msra.mxu0 0.0
  %1209 = vmatprep.subr.mxu0 0.0
  %1210 = vmatpush1.msra.mxu0 0.0
  %1211 = vmatprep.subr.mxu0 0.0
  %1212 = vmatpush1.msra.mxu0 0.0
  %1213 = vmatprep.subr.mxu0 0.0
  %1214 = vmatpush1.msra.mxu0 0.0
  %1215 = vmatprep.subr.mxu0 0.0
  %1216 = vmatpush1.msra.mxu0 0.0
  %1217 = vmatprep.subr.mxu0 0.0
  %1218 = vmatpush1.msra.mxu0 0.0
  %1219 = vmatprep.subr.mxu0 0.0
  %1220 = vmatpush1.msra.mxu0 0.0
  %1221 = vmatprep.mubr.f32.mxu0 0.0
  %1222 = vmatmul.mubr.f32.gmra.mrb[0].mxu0 %v1155
  %v1223 = vpop.f32.mrb[0].mxu0
  %v1224 = vadd.f32 0.0, %v1223
  %v1225 = vpop.f32.mrb[0].mxu0
  %1226 = vdwg.mxu0
  %v1227 = vadd.f32 %v1151, %v1224
  %v1228 = vxor.u32 %v1227, 2147483648
  %v1229 = vmul.f32 %v1228, 1.442695
  %v1230 = vpow.pop %v1229
  %v1231 = vadd.f32 %v1230, 1.0
  %v1232 = vrcp.pop %v1231
  %v1233 = vmul.f32 1.0, %v1232
  %v1234 = vtanh.pop %v1227
  %v1235 = vmul.f32 %v1233, %v1137
  %1237 = vrot.lane.b32.xlu0 %v1234, 64
  %v1238 = vpop.permute.xlu0 %1237
  %v1240 = vmul.f32 %v1233, %v1238
  %1242 = vrot.lane.b32.xlu0 %v1240, 32
  %v1243 = vpop.permute.xlu0 %1242
  %v1245 = vadd.f32 %v1235, %v1243
  %v1246 = vtanh.pop %v1245
  %1248 = vrot.lane.b32.xlu0 %v1246, 64
  %v1249 = vpop.permute.xlu0 %1248
  %v1251 = vmul.f32 %v1233, %v1249
  %vm1252 = vcmp.eq.s32.totalorder %v612, 5
  %v1253 = vsel %vm1252, 1, 0
  %1254 = vset.pattern.permute.xlu0 0
  %1255 = vperm.xlu0 %1254, %v1253
  %v1256 = vpop.permute.xlu0 %1255
  %vm1257 = vcmp.eq.s32.totalorder %v1256, 1
  %v1258 = vsel %vm1257, %v1251, %v1150
  %v1259 = vld [vmem:[#allocation2 + $0x30] sm:$0xff]
  %1261 = vrot.lane.b32.xlu0 %v1251, 32
  %v1262 = vpop.permute.xlu0 %1261
  %v1263 = vsel %vm386, %v1262, 0
  %1265 = vmatprep.subr.mxu0 0.0
  %1266 = vmatpush1.msra.mxu0 %v608
  %1267 = vmatprep.subr.mxu0 0.0
  %1268 = vmatpush1.msra.mxu0 %v609
  %1269 = vmatprep.subr.mxu0 0.0
  %1270 = vmatpush1.msra.mxu0 %v610
  %1271 = vmatprep.subr.mxu0 0.0
  %1272 = vmatpush1.msra.mxu0 %v611
  %1273 = vmatprep.subr.mxu0 0.0
  %1274 = vmatpush1.msra.mxu0 0.0
  %1275 = vmatprep.subr.mxu0 0.0
  %1276 = vmatpush1.msra.mxu0 0.0
  %1277 = vmatprep.subr.mxu0 0.0
  %1278 = vmatpush1.msra.mxu0 0.0
  %1279 = vmatprep.subr.mxu0 0.0
  %1280 = vmatpush1.msra.mxu0 0.0
  %1281 = vmatprep.subr.mxu0 0.0
  %1282 = vmatpush1.msra.mxu0 0.0
  %1283 = vmatprep.subr.mxu0 0.0
  %1284 = vmatpush1.msra.mxu0 0.0
  %1285 = vmatprep.subr.mxu0 0.0
  %1286 = vmatpush1.msra.mxu0 0.0
  %1287 = vmatprep.subr.mxu0 0.0
  %1288 = vmatpush1.msra.mxu0 0.0
  %1289 = vmatprep.subr.mxu0 0.0
  %1290 = vmatpush1.msra.mxu0 0.0
  %1291 = vmatprep.subr.mxu0 0.0
  %1292 = vmatpush1.msra.mxu0 0.0
  %1293 = vmatprep.subr.mxu0 0.0
  %1294 = vmatpush1.msra.mxu0 0.0
  %1295 = vmatprep.subr.mxu0 0.0
  %1296 = vmatpush1.msra.mxu0 0.0
  %1297 = vmatprep.subr.mxu0 0.0
  %1298 = vmatpush1.msra.mxu0 0.0
  %1299 = vmatprep.subr.mxu0 0.0
  %1300 = vmatpush1.msra.mxu0 0.0
  %1301 = vmatprep.subr.mxu0 0.0
  %1302 = vmatpush1.msra.mxu0 0.0
  %1303 = vmatprep.subr.mxu0 0.0
  %1304 = vmatpush1.msra.mxu0 0.0
  %1305 = vmatprep.subr.mxu0 0.0
  %1306 = vmatpush1.msra.mxu0 0.0
  %1307 = vmatprep.subr.mxu0 0.0
  %1308 = vmatpush1.msra.mxu0 0.0
  %1309 = vmatprep.subr.mxu0 0.0
  %1310 = vmatpush1.msra.mxu0 0.0
  %1311 = vmatprep.subr.mxu0 0.0
  %1312 = vmatpush1.msra.mxu0 0.0
  %1313 = vmatprep.subr.mxu0 0.0
  %1314 = vmatpush1.msra.mxu0 0.0
  %1315 = vmatprep.subr.mxu0 0.0
  %1316 = vmatpush1.msra.mxu0 0.0
  %1317 = vmatprep.subr.mxu0 0.0
  %1318 = vmatpush1.msra.mxu0 0.0
  %1319 = vmatprep.subr.mxu0 0.0
  %1320 = vmatpush1.msra.mxu0 0.0
  %1321 = vmatprep.subr.mxu0 0.0
  %1322 = vmatpush1.msra.mxu0 0.0
  %1323 = vmatprep.subr.mxu0 0.0
  %1324 = vmatpush1.msra.mxu0 0.0
  %1325 = vmatprep.subr.mxu0 0.0
  %1326 = vmatpush1.msra.mxu0 0.0
  %1327 = vmatprep.subr.mxu0 0.0
  %1328 = vmatpush1.msra.mxu0 0.0
  %1329 = vmatprep.mubr.f32.mxu0 0.0
  %1330 = vmatmul.mubr.f32.gmra.mrb[0].mxu0 %v1263
  %v1331 = vpop.f32.mrb[0].mxu0
  %v1332 = vadd.f32 0.0, %v1331
  %v1333 = vpop.f32.mrb[0].mxu0
  %1334 = vdwg.mxu0
  %v1335 = vadd.f32 %v1259, %v1332
  %v1336 = vxor.u32 %v1335, 2147483648
  %v1337 = vmul.f32 %v1336, 1.442695
  %v1338 = vpow.pop %v1337
  %v1339 = vadd.f32 %v1338, 1.0
  %v1340 = vrcp.pop %v1339
  %v1341 = vmul.f32 1.0, %v1340
  %v1342 = vtanh.pop %v1335
  %v1343 = vmul.f32 %v1341, %v1245
  %1345 = vrot.lane.b32.xlu0 %v1342, 64
  %v1346 = vpop.permute.xlu0 %1345
  %v1348 = vmul.f32 %v1341, %v1346
  %1350 = vrot.lane.b32.xlu0 %v1348, 32
  %v1351 = vpop.permute.xlu0 %1350
  %v1353 = vadd.f32 %v1343, %v1351
  %v1354 = vtanh.pop %v1353
  %1356 = vrot.lane.b32.xlu0 %v1354, 64
  %v1357 = vpop.permute.xlu0 %1356
  %v1359 = vmul.f32 %v1341, %v1357
  %vm1360 = vcmp.eq.s32.totalorder %v612, 6
  %v1361 = vsel %vm1360, 1, 0
  %1362 = vset.pattern.permute.xlu0 0
  %1363 = vperm.xlu0 %1362, %v1361
  %v1364 = vpop.permute.xlu0 %1363
  %vm1365 = vcmp.eq.s32.totalorder %v1364, 1
  %v1366 = vsel %vm1365, %v1359, %v1258
  %v1367 = vld [vmem:[#allocation2 + $0x38] sm:$0xff]
  %1369 = vrot.lane.b32.xlu0 %v1359, 32
  %v1370 = vpop.permute.xlu0 %1369
  %v1371 = vsel %vm386, %v1370, 0
  %1373 = vmatprep.subr.mxu0 0.0
  %1374 = vmatpush1.msra.mxu0 %v608
  %1375 = vmatprep.subr.mxu0 0.0
  %1376 = vmatpush1.msra.mxu0 %v609
  %1377 = vmatprep.subr.mxu0 0.0
  %1378 = vmatpush1.msra.mxu0 %v610
  %1379 = vmatprep.subr.mxu0 0.0
  %1380 = vmatpush1.msra.mxu0 %v611
  %1381 = vmatprep.subr.mxu0 0.0
  %1382 = vmatpush1.msra.mxu0 0.0
  %1383 = vmatprep.subr.mxu0 0.0
  %1384 = vmatpush1.msra.mxu0 0.0
  %1385 = vmatprep.subr.mxu0 0.0
  %1386 = vmatpush1.msra.mxu0 0.0
  %1387 = vmatprep.subr.mxu0 0.0
  %1388 = vmatpush1.msra.mxu0 0.0
  %1389 = vmatprep.subr.mxu0 0.0
  %1390 = vmatpush1.msra.mxu0 0.0
  %1391 = vmatprep.subr.mxu0 0.0
  %1392 = vmatpush1.msra.mxu0 0.0
  %1393 = vmatprep.subr.mxu0 0.0
  %1394 = vmatpush1.msra.mxu0 0.0
  %1395 = vmatprep.subr.mxu0 0.0
  %1396 = vmatpush1.msra.mxu0 0.0
  %1397 = vmatprep.subr.mxu0 0.0
  %1398 = vmatpush1.msra.mxu0 0.0
  %1399 = vmatprep.subr.mxu0 0.0
  %1400 = vmatpush1.msra.mxu0 0.0
  %1401 = vmatprep.subr.mxu0 0.0
  %1402 = vmatpush1.msra.mxu0 0.0
  %1403 = vmatprep.subr.mxu0 0.0
  %1404 = vmatpush1.msra.mxu0 0.0
  %1405 = vmatprep.subr.mxu0 0.0
  %1406 = vmatpush1.msra.mxu0 0.0
  %1407 = vmatprep.subr.mxu0 0.0
  %1408 = vmatpush1.msra.mxu0 0.0
  %1409 = vmatprep.subr.mxu0 0.0
  %1410 = vmatpush1.msra.mxu0 0.0
  %1411 = vmatprep.subr.mxu0 0.0
  %1412 = vmatpush1.msra.mxu0 0.0
  %1413 = vmatprep.subr.mxu0 0.0
  %1414 = vmatpush1.msra.mxu0 0.0
  %1415 = vmatprep.subr.mxu0 0.0
  %1416 = vmatpush1.msra.mxu0 0.0
  %1417 = vmatprep.subr.mxu0 0.0
  %1418 = vmatpush1.msra.mxu0 0.0
  %1419 = vmatprep.subr.mxu0 0.0
  %1420 = vmatpush1.msra.mxu0 0.0
  %1421 = vmatprep.subr.mxu0 0.0
  %1422 = vmatpush1.msra.mxu0 0.0
  %1423 = vmatprep.subr.mxu0 0.0
  %1424 = vmatpush1.msra.mxu0 0.0
  %1425 = vmatprep.subr.mxu0 0.0
  %1426 = vmatpush1.msra.mxu0 0.0
  %1427 = vmatprep.subr.mxu0 0.0
  %1428 = vmatpush1.msra.mxu0 0.0
  %1429 = vmatprep.subr.mxu0 0.0
  %1430 = vmatpush1.msra.mxu0 0.0
  %1431 = vmatprep.subr.mxu0 0.0
  %1432 = vmatpush1.msra.mxu0 0.0
  %1433 = vmatprep.subr.mxu0 0.0
  %1434 = vmatpush1.msra.mxu0 0.0
  %1435 = vmatprep.subr.mxu0 0.0
  %1436 = vmatpush1.msra.mxu0 0.0
  %1437 = vmatprep.mubr.f32.mxu0 0.0
  %1438 = vmatmul.mubr.f32.gmra.mrb[0].mxu0 %v1371
  %v1439 = vpop.f32.mrb[0].mxu0
  %v1440 = vadd.f32 0.0, %v1439
  %v1441 = vpop.f32.mrb[0].mxu0
  %1442 = vdwg.mxu0
  %v1443 = vadd.f32 %v1367, %v1440
  %v1444 = vxor.u32 %v1443, 2147483648
  %v1445 = vmul.f32 %v1444, 1.442695
  %v1446 = vpow.pop %v1445
  %v1447 = vadd.f32 %v1446, 1.0
  %v1448 = vrcp.pop %v1447
  %v1449 = vmul.f32 1.0, %v1448
  %v1450 = vtanh.pop %v1443
  %v1451 = vmul.f32 %v1449, %v1353
  %1453 = vrot.lane.b32.xlu0 %v1450, 64
  %v1454 = vpop.permute.xlu0 %1453
  %v1456 = vmul.f32 %v1449, %v1454
  %1458 = vrot.lane.b32.xlu0 %v1456, 32
  %v1459 = vpop.permute.xlu0 %1458
  %v1461 = vadd.f32 %v1451, %v1459
  %v1462 = vtanh.pop %v1461
  %1464 = vrot.lane.b32.xlu0 %v1462, 64
  %v1465 = vpop.permute.xlu0 %1464
  %v1467 = vmul.f32 %v1449, %v1465
  %vm1468 = vcmp.eq.s32.totalorder %v612, 7
  %v1469 = vsel %vm1468, 1, 0
  %1470 = vset.pattern.permute.xlu0 0
  %1471 = vperm.xlu0 %1470, %v1469
  %v1472 = vpop.permute.xlu0 %1471
  %vm1473 = vcmp.eq.s32.totalorder %v1472, 1
  %v1474 = vsel %vm1473, %v1467, %v1366
  %1476 = vrot.lane.b32.xlu0 %v1474, 32
  %v1477 = vpop.permute.xlu0 %1476
  %v1478 = vsel %vm386, %v1477, 0
  %1480 = vmatprep.subr.mxu0 0.0
  %1481 = vmatpush1.msra.mxu0 %v524
  %1482 = vmatprep.subr.mxu0 0.0
  %1483 = vmatpush1.msra.mxu0 %v525
  %1484 = vmatprep.subr.mxu0 0.0
  %1485 = vmatpush1.msra.mxu0 %v526
  %1486 = vmatprep.subr.mxu0 0.0
  %1487 = vmatpush1.msra.mxu0 %v527
  %1488 = vmatprep.subr.mxu0 0.0
  %1489 = vmatpush1.msra.mxu0 0.0
  %1490 = vmatprep.subr.mxu0 0.0
  %1491 = vmatpush1.msra.mxu0 0.0
  %1492 = vmatprep.subr.mxu0 0.0
  %1493 = vmatpush1.msra.mxu0 0.0
  %1494 = vmatprep.subr.mxu0 0.0
  %1495 = vmatpush1.msra.mxu0 0.0
  %1496 = vmatprep.subr.mxu0 0.0
  %1497 = vmatpush1.msra.mxu0 0.0
  %1498 = vmatprep.subr.mxu0 0.0
  %1499 = vmatpush1.msra.mxu0 0.0
  %1500 = vmatprep.subr.mxu0 0.0
  %1501 = vmatpush1.msra.mxu0 0.0
  %1502 = vmatprep.subr.mxu0 0.0
  %1503 = vmatpush1.msra.mxu0 0.0
  %1504 = vmatprep.subr.mxu0 0.0
  %1505 = vmatpush1.msra.mxu0 0.0
  %1506 = vmatprep.subr.mxu0 0.0
  %1507 = vmatpush1.msra.mxu0 0.0
  %1508 = vmatprep.subr.mxu0 0.0
  %1509 = vmatpush1.msra.mxu0 0.0
  %1510 = vmatprep.subr.mxu0 0.0
  %1511 = vmatpush1.msra.mxu0 0.0
  %1512 = vmatprep.subr.mxu0 0.0
  %1513 = vmatpush1.msra.mxu0 0.0
  %1514 = vmatprep.subr.mxu0 0.0
  %1515 = vmatpush1.msra.mxu0 0.0
  %1516 = vmatprep.subr.mxu0 0.0
  %1517 = vmatpush1.msra.mxu0 0.0
  %1518 = vmatprep.subr.mxu0 0.0
  %1519 = vmatpush1.msra.mxu0 0.0
  %1520 = vmatprep.subr.mxu0 0.0
  %1521 = vmatpush1.msra.mxu0 0.0
  %1522 = vmatprep.subr.mxu0 0.0
  %1523 = vmatpush1.msra.mxu0 0.0
  %1524 = vmatprep.subr.mxu0 0.0
  %1525 = vmatpush1.msra.mxu0 0.0
  %1526 = vmatprep.subr.mxu0 0.0
  %1527 = vmatpush1.msra.mxu0 0.0
  %1528 = vmatprep.subr.mxu0 0.0
  %1529 = vmatpush1.msra.mxu0 0.0
  %1530 = vmatprep.subr.mxu0 0.0
  %1531 = vmatpush1.msra.mxu0 0.0
  %1532 = vmatprep.subr.mxu0 0.0
  %1533 = vmatpush1.msra.mxu0 0.0
  %1534 = vmatprep.subr.mxu0 0.0
  %1535 = vmatpush1.msra.mxu0 0.0
  %1536 = vmatprep.subr.mxu0 0.0
  %1537 = vmatpush1.msra.mxu0 0.0
  %1538 = vmatprep.subr.mxu0 0.0
  %1539 = vmatpush1.msra.mxu0 0.0
  %1540 = vmatprep.subr.mxu0 0.0
  %1541 = vmatpush1.msra.mxu0 0.0
  %1542 = vmatprep.subr.mxu0 0.0
  %1543 = vmatpush1.msra.mxu0 0.0
  %1544 = vmatprep.mubr.f32.mxu0 0.0
  %1545 = vmatmul.mubr.f32.gmra.mrb[0].mxu0 %v1478
  %v1546 = vpop.f32.mrb[0].mxu0
  %v1547 = vadd.f32 %v605, %v1546
  %v1548 = vpop.f32.mrb[0].mxu0
  %1549 = vdwg.mxu0
  %vm1550 = vcmp.ge.f32.partialorder %v1547, 0.0
  %v1551 = vmul.f32 %v1547, 0.2
  %v1552 = vsel %vm1550, %v1547, %v1551
  %v1553 = vld [vmem:[%s9] sm:$0xff]
  %v1554 = vld [vmem:[%s9 + $0x8] sm:$0xff]
  %v1555 = vld [vmem:[%s9 + $0x10] sm:$0xff]
  %v1556 = vld [vmem:[%s9 + $0x18] sm:$0xff]
  %v1557 = vlaneseq
  %v1558 = vshrl.u32 %v1557, 7
  %v1559 = vsub.s32 0, %v1558
  %v1560 = vrot.slane %v45, %v1559
  %v1562 = vsel %vm386, %v1552, 0
  %1564 = vmatprep.subr.mxu0 0.0
  %1565 = vmatpush1.msra.mxu0 %v1553
  %1566 = vmatprep.subr.mxu0 0.0
  %1567 = vmatpush1.msra.mxu0 %v1554
  %1568 = vmatprep.subr.mxu0 0.0
  %1569 = vmatpush1.msra.mxu0 %v1555
  %1570 = vmatprep.subr.mxu0 0.0
  %1571 = vmatpush1.msra.mxu0 %v1556
  %1572 = vmatprep.subr.mxu0 0.0
  %1573 = vmatpush1.msra.mxu0 0.0
  %1574 = vmatprep.subr.mxu0 0.0
  %1575 = vmatpush1.msra.mxu0 0.0
  %1576 = vmatprep.subr.mxu0 0.0
  %1577 = vmatpush1.msra.mxu0 0.0
  %1578 = vmatprep.subr.mxu0 0.0
  %1579 = vmatpush1.msra.mxu0 0.0
  %1580 = vmatprep.subr.mxu0 0.0
  %1581 = vmatpush1.msra.mxu0 0.0
  %1582 = vmatprep.subr.mxu0 0.0
  %1583 = vmatpush1.msra.mxu0 0.0
  %1584 = vmatprep.subr.mxu0 0.0
  %1585 = vmatpush1.msra.mxu0 0.0
  %1586 = vmatprep.subr.mxu0 0.0
  %1587 = vmatpush1.msra.mxu0 0.0
  %1588 = vmatprep.subr.mxu0 0.0
  %1589 = vmatpush1.msra.mxu0 0.0
  %1590 = vmatprep.subr.mxu0 0.0
  %1591 = vmatpush1.msra.mxu0 0.0
  %1592 = vmatprep.subr.mxu0 0.0
  %1593 = vmatpush1.msra.mxu0 0.0
  %1594 = vmatprep.subr.mxu0 0.0
  %1595 = vmatpush1.msra.mxu0 0.0
  %1596 = vmatprep.subr.mxu0 0.0
  %1597 = vmatpush1.msra.mxu0 0.0
  %1598 = vmatprep.subr.mxu0 0.0
  %1599 = vmatpush1.msra.mxu0 0.0
  %1600 = vmatprep.subr.mxu0 0.0
  %1601 = vmatpush1.msra.mxu0 0.0
  %1602 = vmatprep.subr.mxu0 0.0
  %1603 = vmatpush1.msra.mxu0 0.0
  %1604 = vmatprep.subr.mxu0 0.0
  %1605 = vmatpush1.msra.mxu0 0.0
  %1606 = vmatprep.subr.mxu0 0.0
  %1607 = vmatpush1.msra.mxu0 0.0
  %1608 = vmatprep.subr.mxu0 0.0
  %1609 = vmatpush1.msra.mxu0 0.0
  %1610 = vmatprep.subr.mxu0 0.0
  %1611 = vmatpush1.msra.mxu0 0.0
  %1612 = vmatprep.subr.mxu0 0.0
  %1613 = vmatpush1.msra.mxu0 0.0
  %1614 = vmatprep.subr.mxu0 0.0
  %1615 = vmatpush1.msra.mxu0 0.0
  %1616 = vmatprep.subr.mxu0 0.0
  %1617 = vmatpush1.msra.mxu0 0.0
  %1618 = vmatprep.subr.mxu0 0.0
  %1619 = vmatpush1.msra.mxu0 0.0
  %1620 = vmatprep.subr.mxu0 0.0
  %1621 = vmatpush1.msra.mxu0 0.0
  %1622 = vmatprep.subr.mxu0 0.0
  %1623 = vmatpush1.msra.mxu0 0.0
  %1624 = vmatprep.subr.mxu0 0.0
  %1625 = vmatpush1.msra.mxu0 0.0
  %1626 = vmatprep.subr.mxu0 0.0
  %1627 = vmatpush1.msra.mxu0 0.0
  %1628 = vmatprep.mubr.f32.mxu0 0.0
  %1629 = vmatmul.mubr.f32.gmra.mrb[0].mxu0 %v1562
  %v1630 = vpop.f32.mrb[0].mxu0
  %v1631 = vadd.f32 %v1560, %v1630
  %v1632 = vpop.f32.mrb[0].mxu0
  %1633 = vdwg.mxu0
  %vm1634 = vcmp.ge.f32.partialorder %v1631, 0.0
  %v1635 = vmul.f32 %v1631, 0.2
  %v1636 = vsel %vm1634, %v1631, %v1635
  %v1637 = vld [vmem:[%s10] sm:$0xff]
  %v1638 = vld [vmem:[%s10 + $0x8] sm:$0xff]
  %v1639 = vlaneseq
  %v1640 = vshrl.u32 %v1639, 7
  %v1641 = vsub.s32 0, %v1640
  %v1642 = vrot.slane %v46, %v1641
  %v1644 = vsel %vm224, %v1636, 0
  %1646 = vmatprep.subr.mxu0 0.0
  %1647 = vmatpush1.msra.mxu0 %v1637
  %1648 = vmatprep.subr.mxu0 0.0
  %1649 = vmatpush1.msra.mxu0 %v1638
  %1650 = vmatprep.subr.mxu0 0.0
  %1651 = vmatpush1.msra.mxu0 0.0
  %1652 = vmatprep.subr.mxu0 0.0
  %1653 = vmatpush1.msra.mxu0 0.0
  %1654 = vmatprep.subr.mxu0 0.0
  %1655 = vmatpush1.msra.mxu0 0.0
  %1656 = vmatprep.subr.mxu0 0.0
  %1657 = vmatpush1.msra.mxu0 0.0
  %1658 = vmatprep.subr.mxu0 0.0
  %1659 = vmatpush1.msra.mxu0 0.0
  %1660 = vmatprep.subr.mxu0 0.0
  %1661 = vmatpush1.msra.mxu0 0.0
  %1662 = vmatprep.subr.mxu0 0.0
  %1663 = vmatpush1.msra.mxu0 0.0
  %1664 = vmatprep.subr.mxu0 0.0
  %1665 = vmatpush1.msra.mxu0 0.0
  %1666 = vmatprep.subr.mxu0 0.0
  %1667 = vmatpush1.msra.mxu0 0.0
  %1668 = vmatprep.subr.mxu0 0.0
  %1669 = vmatpush1.msra.mxu0 0.0
  %1670 = vmatprep.subr.mxu0 0.0
  %1671 = vmatpush1.msra.mxu0 0.0
  %1672 = vmatprep.subr.mxu0 0.0
  %1673 = vmatpush1.msra.mxu0 0.0
  %1674 = vmatprep.subr.mxu0 0.0
  %1675 = vmatpush1.msra.mxu0 0.0
  %1676 = vmatprep.subr.mxu0 0.0
  %1677 = vmatpush1.msra.mxu0 0.0
  %1678 = vmatprep.subr.mxu0 0.0
  %1679 = vmatpush1.msra.mxu0 0.0
  %1680 = vmatprep.subr.mxu0 0.0
  %1681 = vmatpush1.msra.mxu0 0.0
  %1682 = vmatprep.subr.mxu0 0.0
  %1683 = vmatpush1.msra.mxu0 0.0
  %1684 = vmatprep.subr.mxu0 0.0
  %1685 = vmatpush1.msra.mxu0 0.0
  %1686 = vmatprep.subr.mxu0 0.0
  %1687 = vmatpush1.msra.mxu0 0.0
  %1688 = vmatprep.subr.mxu0 0.0
  %1689 = vmatpush1.msra.mxu0 0.0
  %1690 = vmatprep.subr.mxu0 0.0
  %1691 = vmatpush1.msra.mxu0 0.0
  %1692 = vmatprep.subr.mxu0 0.0
  %1693 = vmatpush1.msra.mxu0 0.0
  %1694 = vmatprep.subr.mxu0 0.0
  %1695 = vmatpush1.msra.mxu0 0.0
  %1696 = vmatprep.subr.mxu0 0.0
  %1697 = vmatpush1.msra.mxu0 0.0
  %1698 = vmatprep.subr.mxu0 0.0
  %1699 = vmatpush1.msra.mxu0 0.0
  %1700 = vmatprep.subr.mxu0 0.0
  %1701 = vmatpush1.msra.mxu0 0.0
  %1702 = vmatprep.subr.mxu0 0.0
  %1703 = vmatpush1.msra.mxu0 0.0
  %1704 = vmatprep.subr.mxu0 0.0
  %1705 = vmatpush1.msra.mxu0 0.0
  %1706 = vmatprep.subr.mxu0 0.0
  %1707 = vmatpush1.msra.mxu0 0.0
  %1708 = vmatprep.subr.mxu0 0.0
  %1709 = vmatpush1.msra.mxu0 0.0
  %1710 = vmatprep.mubr.f32.mxu0 0.0
  %1711 = vmatmul.mubr.f32.gmra.mrb[0].mxu0 %v1644
  %v1712 = vpop.f32.mrb[0].mxu0
  %v1713 = vadd.f32 %v1642, %v1712
  %v1714 = vpop.f32.mrb[0].mxu0
  %1715 = vdwg.mxu0
  %v1716 = vld [vmem:[%s3] sm:$0xff]
  %v1717 = vadd.f32 %v1713, %v1716
  %vm1718 = vcmask 15360
  %1719 = vst.msk [vmem:[%s12] sm:$0xff] %vm1718, %v1717
  // Predicated region
  $region50: #{generator_forward.1} parent=0 // pred_check
    _
  $region51: #{generator_forward.1} parent=0 // pred_check_branch
    %1721 = sbr.rel (0) target = $region53
  $region52: #{generator_forward.1} parent=0 // pred_region
    _
  $region53: #{generator_forward.1} parent=0 // pred_fallthru
    _
  // Predicated region
  $region54: #{generator_forward.1} parent=0 // pred_check
    _
  $region55: #{generator_forward.1} parent=0 // pred_check_branch
    %1723 = sbr.rel (0) target = $region57
  $region56: #{generator_forward.1} parent=0 // pred_region
    _
  $region57: #{generator_forward.1} parent=0 // pred_fallthru
    _

</llo_original>
